<compile_context>
chip_gen: v7x
topology: tpu7x:2x2x1
jax: 0.10.0
libtpu: 0.0.40
codegen_flags: <defaults>
</compile_context>

<pallas_src>
import jax
import jax.numpy as jnp
import numpy as np
from jax.experimental import pallas as pl
from jax.experimental.pallas import tpu as pltpu

# Small, lane-aligned stand-ins for (768, 1024, mlp_size, output_size).
B = 2        # batch
NV = 16      # visual local tokens (ViT patches, CLS dropped)
NG = 2       # visual global tokens (resnet global + ViT CLS) -- fixed at 2
NL = 8       # text tokens (seq_max_len)
D_IN = 128   # encoder width (stands in for 768)
D_ATT = 256  # attention projection width (stands in for 1024)
D_MLP = 256  # fusion hidden (encoder_config.mlp_size)
D_OUT = 128  # output_size (stands in for 1024)


def bivision_kernel(v_ref, vg_ref, q_ref, g1_ref, g2_ref,
                    wv1_ref, wv2_ref, wl_ref, bv1_ref, bv2_ref, bl_ref,
                    wf_hbm, bf_ref,
                    out_ref,
                    wf_vmem, wf_sem):
    f32 = jnp.float32
    bf16 = jnp.bfloat16

    # Overlap the largest weight DMA (folded fusion MLP) with all of the
    # projection / attention work; it is only consumed by the final matmul.
    wf_copy = pltpu.make_async_copy(wf_hbm, wf_vmem, wf_sem)
    wf_copy.start()

    # ---- projections: bf16 activations x bf16 weights, f32 accumulation ----
    v_proj_flat = (jnp.dot(v_ref[...].astype(bf16), wv1_ref[...],
                           preferred_element_type=f32) + bv1_ref[...])   # (B*NV, D_ATT)
    q_proj_flat = (jnp.dot(q_ref[...].astype(bf16), wl_ref[...],
                           preferred_element_type=f32) + bl_ref[...])    # (B*NL, D_ATT)
    # lane dim unchanged and row counts 8-aligned -> layout-free reshapes
    v_proj = v_proj_flat.reshape(B, NV, D_ATT)
    q_proj = q_proj_flat.reshape(B, NL, D_ATT)

    # ---------- local branch (batched over B) ----------
    # sim1[b, l, v] = <q_proj[b, l], v_proj[b, v]> : ONE batched MXU dot_general
    sim1 = jnp.einsum('bld,bvd->blv', q_proj, v_proj,
                      preferred_element_type=f32)                        # (B, NL, NV)
    kg1 = jnp.max(sim1, axis=1)                                          # topk k=1 -> (B, NV)
    lg1 = kg1 + g1_ref[...]
    lg1 = lg1 - jnp.max(lg1, axis=-1, keepdims=True)
    e1 = jnp.exp(lg1)
    a1 = e1 * pl.reciprocal(jnp.sum(e1, axis=-1, keepdims=True),
                            approx=True)                                 # (B, NV)

    # head1 for the whole batch as ONE MXU matmul: build the (B, B*NV)
    # block-diagonal attention matrix A[b, b*NV + n] = a1[b, n] from iota
    # compares + a tiny replication matmul (no jnp.tile / relayout reshapes).
    n_i = jax.lax.broadcasted_iota(jnp.int32, (NV, B * NV), 0)
    j_i = jax.lax.broadcasted_iota(jnp.int32, (NV, B * NV), 1)
    rep = jnp.zeros((NV, B * NV), f32)
    for k in range(B):                                   # B static & tiny -> unrolled
        rep = rep + (j_i == n_i + k * NV).astype(f32)
    a1_tiled = jnp.dot(a1, rep, preferred_element_type=f32)              # (B, B*NV)
    b_i = jax.lax.broadcasted_iota(jnp.int32, (B, B * NV), 0)
    c_i = jax.lax.broadcasted_iota(jnp.int32, (B, B * NV), 1)
    in_block = jnp.logical_and(c_i >= b_i * NV, c_i < (b_i + 1) * NV)
    a1_bd = jnp.where(in_block, a1_tiled, 0.0)                           # block diagonal
    head1 = jnp.dot(a1_bd, v_proj_flat, preferred_element_type=f32)      # (B, D_ATT)

    # ---------- global branch (NG == 2 tokens; per-batch, plain leading-axis loads) ----------
    nt = (((1,), (1,)), ((), ()))     # contract last dims of both operands (a @ b.T)
    head2_rows = []
    for b in range(B):                # B is tiny & static -> unrolled
        vgb = (jnp.dot(vg_ref[b].astype(bf16), wv2_ref[...],
                       preferred_element_type=f32) + bv2_ref[...])       # (NG, D_ATT)
        sim2 = jax.lax.dot_general(vgb, q_proj[b], nt,
                                   preferred_element_type=f32)           # (NG, NL)
        kg2 = jnp.max(sim2, axis=-1, keepdims=True)                      # (NG, 1)
        lg2 = kg2 + g2_ref[b]
        lg2 = lg2 - jnp.max(lg2, axis=0, keepdims=True)
        e2 = jnp.exp(lg2)
        a2 = e2 * pl.reciprocal(jnp.sum(e2, axis=0, keepdims=True),
                                approx=True)                             # (NG, 1)
        head2_rows.append(jnp.sum(a2 * vgb, axis=0, keepdims=True))      # (1, D_ATT)
    head2 = jnp.concatenate(head2_rows, axis=0)                          # (B, D_ATT)

    # ---- folded fusion MLP (h stays vreg-resident; no VMEM scratch round-trip) ----
    h = jnp.concatenate([head1, head2], axis=-1)                         # (B, 2*D_ATT)
    wf_copy.wait()                    # folded weight only needed from here on
    x = jnp.dot(h, wf_vmem[...], preferred_element_type=f32) + bf_ref[...]
    out_ref[...] = jnp.maximum(x, 0.0)


_VMEM = pl.BlockSpec(memory_space=pltpu.MemorySpace.VMEM)
_HBM = pl.BlockSpec(memory_space=pl.ANY)

_COST = pl.CostEstimate(
    flops=(2 * B * (NV + NG + NL) * D_IN * D_ATT          # projections
           + 2 * B * NL * (NV + NG) * D_ATT                # similarities
           + 2 * B * (NV + NG) * D_ATT                     # attention heads
           + 2 * B * (2 * D_ATT) * D_OUT),                 # folded fusion MLP
    transcendentals=B * (NV + NG + 2),
    bytes_accessed=(2 * 3 * D_IN * D_ATT                               # bf16 proj weights
                    + 4 * (2 * D_ATT * D_OUT + 3 * D_ATT + D_OUT)      # f32 folded W + biases
                    + 4 * B * ((NV + NG + NL) * D_IN + NV + NG + D_OUT)))


@jax.jit
def bivision_forward(image_local_embeds, image_global_embeds, question_embeds,
                     gumbel_local, gumbel_global, kernel_params):
    wv1, wv2, wl, bv1, bv2, bl, w_fold, b_fold = kernel_params
    v_flat = image_local_embeds.reshape(B * NV, D_IN)
    q_flat = question_embeds.reshape(B * NL, D_IN)
    g2 = gumbel_global.reshape(B, NG, 1)      # sublane-dense for the (NG, 1) softmax
    return pl.pallas_call(
        bivision_kernel,
        out_shape=jax.ShapeDtypeStruct((B, D_OUT), jnp.float32),
        in_specs=[_VMEM] * 11 + [_HBM, _VMEM],          # w_fold stays in HBM, DMA'd manually
        out_specs=_VMEM,
        scratch_shapes=[pltpu.VMEM((2 * D_ATT, D_OUT), jnp.float32),
                        pltpu.SemaphoreType.DMA],
        compiler_params=pltpu.CompilerParams(vmem_limit_bytes=32 * 1024 * 1024),
        cost_estimate=_COST,
    )(v_flat, image_global_embeds, q_flat, gumbel_local, g2,
      wv1, wv2, wl, bv1, bv2, bl, w_fold, b_fold)


def prepare_kernel_params(params):
    """Offline param prep: fold the activation-free fusion MLP (fc1->fc2->fc3,
    dropout==identity in eval mode, ReLU only after fc3) into one affine map,
    and store the projection weights in bf16 for the single-pass bf16 MXU path.
    The folded weight is kept in f32 (one matrix) so the wide contraction does
    not compound bf16 rounding."""
    (wv1, bv1, wv2, bv2, wl, bl, w1, b1, w2, b2, w3, b3) = params
    hp = jax.lax.Precision.HIGHEST
    w_fold = jnp.dot(jnp.dot(w1, w2, precision=hp), w3, precision=hp)
    b_fold = jnp.dot(jnp.dot(b1, w2, precision=hp) + b2, w3, precision=hp) + b3
    bf16 = jnp.bfloat16
    return (wv1.astype(bf16), wv2.astype(bf16), wl.astype(bf16),
            bv1, bv2, bl, w_fold, b_fold)


def reference_forward(v, vg, q, g1, g2, params):
    """Pure-JAX reference of the original (unfolded) module math, f32."""
    (wv1, bv1, wv2, bv2, wl, bl, w1, b1, w2, b2, w3, b3) = params
    hp = jax.lax.Precision.HIGHEST
    vp = jnp.einsum('bnd,de->bne', v, wv1, precision=hp) + bv1
    vgp = jnp.einsum('bnd,de->bne', vg, wv2, precision=hp) + bv2
    qp = jnp.einsum('bnd,de->bne', q, wl, precision=hp) + bl

    sim1 = jnp.einsum('bvd,bld->bvl', vp, qp, precision=hp)
    kg1 = jnp.max(sim1, axis=-1)                              # topk k=1
    a1 = jax.nn.softmax(kg1 + g1, axis=-1)
    head1 = jnp.sum(vp * a1[..., None], axis=-2)

    sim2 = jnp.einsum('bvd,bld->bvl', vgp, qp, precision=hp)
    kg2 = jnp.max(sim2, axis=-1)
    a2 = jax.nn.softmax(kg2 + g2, axis=-1)
    head2 = jnp.sum(vgp * a2[..., None], axis=-2)

    h = jnp.concatenate([head1, head2], axis=-1)
    hid = jnp.dot(h, w1, precision=hp) + b1
    x = jnp.dot(hid, w2, precision=hp) + b2
    x = jnp.dot(x, w3, precision=hp) + b3
    return jnp.maximum(x, 0.0)


def make_linear(key, fan_in, fan_out):
    kw, kb = jax.random.split(key)
    bound = 1.0 / np.sqrt(fan_in)
    w = jax.random.uniform(kw, (fan_in, fan_out), jnp.float32, -bound, bound)
    b = jax.random.uniform(kb, (1, fan_out), jnp.float32, -bound, bound)
    # Round weights to bf16-representable values so the bf16 kernel weights and
    # the f32 reference use bit-identical parameter values.
    w = w.astype(jnp.bfloat16).astype(jnp.float32)
    return w, b


if __name__ == "__main__":
    key = jax.random.PRNGKey(0)
    keys = jax.random.split(key, 10)

    def bf16_round(x):
        # Kernel casts activations to bf16 before the MXU; use bf16-representable
        # test data so kernel and f32 reference see bit-identical inputs.
        return x.astype(jnp.bfloat16).astype(jnp.float32)

    # Stand-ins for the (untranslated) ViT / ResNet / BERT / LXRT encoder outputs.
    image_local_embeds = bf16_round(jax.random.normal(keys[0], (B, NV, D_IN), jnp.float32))
    image_global_embeds = bf16_round(jax.random.normal(keys[1], (B, NG, D_IN), jnp.float32))
    question_embeds = bf16_round(jax.random.normal(keys[2], (B, NL, D_IN), jnp.float32))

    # Deterministic gumbel noise for both gumbel_softmax calls (tau = 1).
    u1 = jax.random.uniform(keys[3], (B, NV), jnp.float32, 1e-6, 1.0 - 1e-6)
    u2 = jax.random.uniform(keys[4], (B, NG), jnp.float32, 1e-6, 1.0 - 1e-6)
    gumbel_local = -jnp.log(-jnp.log(u1))
    gumbel_global = -jnp.log(-jnp.log(u2))

    wv1, bv1 = make_linear(keys[5], D_IN, D_ATT)       # v_att_proj1
    wv2, bv2 = make_linear(keys[6], D_IN, D_ATT)       # v_att_proj2
    wl, bl = make_linear(keys[7], D_IN, D_ATT)         # l_att_proj
    w1, b1 = make_linear(keys[8], 2 * D_ATT, D_MLP)    # fusion.fc1
    k9a, k9b = jax.random.split(keys[9])
    w2, b2 = make_linear(k9a, D_MLP, D_MLP)            # fusion.fc2
    w3, b3 = make_linear(k9b, D_MLP, D_OUT)            # fusion.fc3
    params = (wv1, bv1, wv2, bv2, wl, bl, w1, b1, w2, b2, w3, b3)

    kernel_params = prepare_kernel_params(params)

    logits = bivision_forward(image_local_embeds, image_global_embeds,
                              question_embeds, gumbel_local, gumbel_global,
                              kernel_params)
    logits = jax.block_until_ready(logits)

    ref = reference_forward(image_local_embeds, image_global_embeds,
                            question_embeds, gumbel_local, gumbel_global, params)
    # Tolerance covers the approximate-reciprocal softmax normalization and the
    # different (but all effectively-f32) matmul accumulation orders.
    np.testing.assert_allclose(np.asarray(logits), np.asarray(ref),
                               rtol=1e-2, atol=3e-3)
    assert logits.shape == (B, D_OUT)
    print("KERNEL_OK")
</pallas_src>

<mosaic_0001>
module attributes {stable_mosaic.version = 11 : i64} {
  func.func @bivision_kernel(%arg0: memref<32x128xf32, #tpu.memory_space<vmem>>, %arg1: memref<2x2x128xf32, #tpu.memory_space<vmem>>, %arg2: memref<16x128xf32, #tpu.memory_space<vmem>>, %arg3: memref<2x16xf32, #tpu.memory_space<vmem>>, %arg4: memref<2x2x1xf32, #tpu.memory_space<vmem>>, %arg5: memref<128x256xbf16, #tpu.memory_space<vmem>>, %arg6: memref<128x256xbf16, #tpu.memory_space<vmem>>, %arg7: memref<128x256xbf16, #tpu.memory_space<vmem>>, %arg8: memref<1x256xf32, #tpu.memory_space<vmem>>, %arg9: memref<1x256xf32, #tpu.memory_space<vmem>>, %arg10: memref<1x256xf32, #tpu.memory_space<vmem>>, %arg11: memref<512x128xf32, #tpu.memory_space<any>>, %arg12: memref<1x128xf32, #tpu.memory_space<vmem>>, %arg13: memref<2x128xf32, #tpu.memory_space<vmem>>, %arg14: memref<512x128xf32, #tpu.memory_space<vmem>>, %arg15: memref<!tpu.dma_semaphore, #tpu.memory_space<semaphore_mem>>) attributes {dimension_semantics = [], scalar_prefetch = 0 : i64, scratch_operands = 2 : i64, tpu.core_type = #tpu.core_type<tc>} {
    tpu.enqueue_dma source(%arg11 : memref<512x128xf32, #tpu.memory_space<any>>) target(%arg14 : memref<512x128xf32, #tpu.memory_space<vmem>>) target_semaphore(%arg15 : memref<!tpu.dma_semaphore, #tpu.memory_space<semaphore_mem>>)
    %c0 = arith.constant 0 : index
    %c0_0 = arith.constant 0 : index
    %0 = vector.load %arg0[%c0, %c0_0] : memref<32x128xf32, #tpu.memory_space<vmem>>, vector<32x128xf32>
    %1 = arith.truncf %0 : vector<32x128xf32> to vector<32x128xbf16>
    %c0_1 = arith.constant 0 : index
    %c0_2 = arith.constant 0 : index
    %2 = vector.load %arg5[%c0_1, %c0_2] : memref<128x256xbf16, #tpu.memory_space<vmem>>, vector<128x256xbf16>
    %cst = arith.constant dense<0.000000e+00> : vector<32x256xf32>
    %3 = tpu.matmul %1, %2, %cst {dimension_numbers = #tpu.dot_dimension_numbers<[1], [0], [0], [1], [0, 0, 1, 1], [], []>} : vector<32x128xbf16>, vector<128x256xbf16>, vector<32x256xf32> -> vector<32x256xf32>
    %c0_3 = arith.constant 0 : index
    %c0_4 = arith.constant 0 : index
    %4 = vector.load %arg8[%c0_3, %c0_4] : memref<1x256xf32, #tpu.memory_space<vmem>>, vector<1x256xf32>
    %5 = vector.broadcast %4 : vector<1x256xf32> to vector<32x256xf32>
    %6 = arith.addf %3, %5 : vector<32x256xf32>
    %c0_5 = arith.constant 0 : index
    %c0_6 = arith.constant 0 : index
    %7 = vector.load %arg2[%c0_5, %c0_6] : memref<16x128xf32, #tpu.memory_space<vmem>>, vector<16x128xf32>
    %8 = arith.truncf %7 : vector<16x128xf32> to vector<16x128xbf16>
    %c0_7 = arith.constant 0 : index
    %c0_8 = arith.constant 0 : index
    %9 = vector.load %arg7[%c0_7, %c0_8] : memref<128x256xbf16, #tpu.memory_space<vmem>>, vector<128x256xbf16>
    %cst_9 = arith.constant dense<0.000000e+00> : vector<16x256xf32>
    %10 = tpu.matmul %8, %9, %cst_9 {dimension_numbers = #tpu.dot_dimension_numbers<[1], [0], [0], [1], [0, 0, 1, 1], [], []>} : vector<16x128xbf16>, vector<128x256xbf16>, vector<16x256xf32> -> vector<16x256xf32>
    %c0_10 = arith.constant 0 : index
    %c0_11 = arith.constant 0 : index
    %11 = vector.load %arg10[%c0_10, %c0_11] : memref<1x256xf32, #tpu.memory_space<vmem>>, vector<1x256xf32>
    %12 = vector.broadcast %11 : vector<1x256xf32> to vector<16x256xf32>
    %13 = arith.addf %10, %12 : vector<16x256xf32>
    %14 = vector.shape_cast %6 : vector<32x256xf32> to vector<2x16x256xf32>
    %15 = vector.shape_cast %13 : vector<16x256xf32> to vector<2x8x256xf32>
    "tpu.trace_start"() <{level = 10 : i32, message = "bld,bvd->blv"}> : () -> ()
    %cst_12 = arith.constant dense<0.000000e+00> : vector<2x8x16xf32>
    %16 = tpu.matmul %15, %14, %cst_12 {dimension_numbers = #tpu.dot_dimension_numbers<[2], [2], [1], [1], [0, 0, 0, 1, 1, 1], [0], [0]>} : vector<2x8x256xf32>, vector<2x16x256xf32>, vector<2x8x16xf32> -> vector<2x8x16xf32>
    "tpu.trace_stop"() : () -> ()
    %cst_13 = arith.constant dense<0xFF800000> : vector<2x16xf32>
    %17 = vector.multi_reduction <maximumf>, %16, %cst_13 [1] : vector<2x8x16xf32> to vector<2x16xf32>
    %c0_14 = arith.constant 0 : index
    %c0_15 = arith.constant 0 : index
    %18 = vector.load %arg3[%c0_14, %c0_15] : memref<2x16xf32, #tpu.memory_space<vmem>>, vector<2x16xf32>
    %19 = arith.addf %17, %18 : vector<2x16xf32>
    %cst_16 = arith.constant dense<0xFF800000> : vector<2xf32>
    %20 = vector.multi_reduction <maximumf>, %19, %cst_16 [1] : vector<2x16xf32> to vector<2xf32>
    %21 = vector.shape_cast %20 : vector<2xf32> to vector<2x1xf32>
    %22 = vector.broadcast %21 : vector<2x1xf32> to vector<2x16xf32>
    %23 = arith.subf %19, %22 : vector<2x16xf32>
    %24 = math.exp %23 : vector<2x16xf32>
    %cst_17 = arith.constant dense<0.000000e+00> : vector<2xf32>
    %25 = vector.multi_reduction <add>, %24, %cst_17 [1] : vector<2x16xf32> to vector<2xf32>
    %26 = vector.shape_cast %25 : vector<2xf32> to vector<2x1xf32>
    %27 = tpu.reciprocal %26 {approx = true} : vector<2x1xf32> -> vector<2x1xf32>
    %28 = vector.broadcast %27 : vector<2x1xf32> to vector<2x16xf32>
    %29 = arith.mulf %24, %28 : vector<2x16xf32>
    %30 = tpu.iota {dimensions = array<i32: 0>} : vector<16x32xi32>
    %31 = tpu.iota {dimensions = array<i32: 1>} : vector<16x32xi32>
    %cst_18 = arith.constant 0.000000e+00 : f32
    %32 = vector.broadcast %cst_18 : f32 to vector<16x32xf32>
    %c0_i32 = arith.constant 0 : i32
    %33 = vector.broadcast %c0_i32 : i32 to vector<16x32xi32>
    %34 = arith.addi %30, %33 : vector<16x32xi32>
    %35 = arith.cmpi eq, %31, %34 : vector<16x32xi32>
    %36 = arith.extui %35 : vector<16x32xi1> to vector<16x32xi32>
    %37 = arith.sitofp %36 : vector<16x32xi32> to vector<16x32xf32>
    %38 = arith.addf %32, %37 : vector<16x32xf32>
    %c16_i32 = arith.constant 16 : i32
    %39 = vector.broadcast %c16_i32 : i32 to vector<16x32xi32>
    %40 = arith.addi %30, %39 : vector<16x32xi32>
    %41 = arith.cmpi eq, %31, %40 : vector<16x32xi32>
    %42 = arith.extui %41 : vector<16x32xi1> to vector<16x32xi32>
    %43 = arith.sitofp %42 : vector<16x32xi32> to vector<16x32xf32>
    %44 = arith.addf %38, %43 : vector<16x32xf32>
    %cst_19 = arith.constant dense<0.000000e+00> : vector<2x32xf32>
    %45 = tpu.matmul %29, %44, %cst_19 {dimension_numbers = #tpu.dot_dimension_numbers<[1], [0], [0], [1], [0, 0, 1, 1], [], []>} : vector<2x16xf32>, vector<16x32xf32>, vector<2x32xf32> -> vector<2x32xf32>
    %46 = tpu.iota {dimensions = array<i32: 0>} : vector<2x32xi32>
    %47 = tpu.iota {dimensions = array<i32: 1>} : vector<2x32xi32>
    %c16_i32_20 = arith.constant 16 : i32
    %48 = vector.broadcast %c16_i32_20 : i32 to vector<2x32xi32>
    %49 = arith.muli %46, %48 : vector<2x32xi32>
    %50 = arith.cmpi sge, %47, %49 : vector<2x32xi32>
    %c1_i32 = arith.constant 1 : i32
    %51 = vector.broadcast %c1_i32 : i32 to vector<2x32xi32>
    %52 = arith.addi %46, %51 : vector<2x32xi32>
    %c16_i32_21 = arith.constant 16 : i32
    %53 = vector.broadcast %c16_i32_21 : i32 to vector<2x32xi32>
    %54 = arith.muli %52, %53 : vector<2x32xi32>
    %55 = arith.cmpi slt, %47, %54 : vector<2x32xi32>
    %56 = arith.andi %50, %55 : vector<2x32xi1>
    %cst_22 = arith.constant 0.000000e+00 : f32
    %57 = vector.broadcast %cst_22 : f32 to vector<2x32xf32>
    %58 = arith.select %56, %45, %57 : vector<2x32xi1>, vector<2x32xf32>
    %cst_23 = arith.constant dense<0.000000e+00> : vector<2x256xf32>
    %59 = tpu.matmul %58, %6, %cst_23 {dimension_numbers = #tpu.dot_dimension_numbers<[1], [0], [0], [1], [0, 0, 1, 1], [], []>} : vector<2x32xf32>, vector<32x256xf32>, vector<2x256xf32> -> vector<2x256xf32>
    %c0_24 = arith.constant 0 : index
    %c0_25 = arith.constant 0 : index
    %c0_26 = arith.constant 0 : index
    %60 = vector.load %arg1[%c0_24, %c0_25, %c0_26] : memref<2x2x128xf32, #tpu.memory_space<vmem>>, vector<1x2x128xf32>
    %61 = vector.shape_cast %60 : vector<1x2x128xf32> to vector<2x128xf32>
    %62 = arith.truncf %61 : vector<2x128xf32> to vector<2x128xbf16>
    %c0_27 = arith.constant 0 : index
    %c0_28 = arith.constant 0 : index
    %63 = vector.load %arg6[%c0_27, %c0_28] : memref<128x256xbf16, #tpu.memory_space<vmem>>, vector<128x256xbf16>
    %cst_29 = arith.constant dense<0.000000e+00> : vector<2x256xf32>
    %64 = tpu.matmul %62, %63, %cst_29 {dimension_numbers = #tpu.dot_dimension_numbers<[1], [0], [0], [1], [0, 0, 1, 1], [], []>} : vector<2x128xbf16>, vector<128x256xbf16>, vector<2x256xf32> -> vector<2x256xf32>
    %c0_30 = arith.constant 0 : index
    %c0_31 = arith.constant 0 : index
    %65 = vector.load %arg9[%c0_30, %c0_31] : memref<1x256xf32, #tpu.memory_space<vmem>>, vector<1x256xf32>
    %66 = vector.broadcast %65 : vector<1x256xf32> to vector<2x256xf32>
    %67 = arith.addf %64, %66 : vector<2x256xf32>
    %68 = vector.extract_strided_slice %15 {offsets = [0, 0, 0], sizes = [1, 8, 256], strides = [1, 1, 1]} : vector<2x8x256xf32> to vector<1x8x256xf32>
    %69 = vector.shape_cast %68 : vector<1x8x256xf32> to vector<8x256xf32>
    %cst_32 = arith.constant dense<0.000000e+00> : vector<2x8xf32>
    %70 = tpu.matmul %67, %69, %cst_32 {dimension_numbers = #tpu.dot_dimension_numbers<[1], [1], [0], [0], [0, 0, 1, 0], [], []>} : vector<2x256xf32>, vector<8x256xf32>, vector<2x8xf32> -> vector<2x8xf32>
    %cst_33 = arith.constant dense<0xFF800000> : vector<2xf32>
    %71 = vector.multi_reduction <maximumf>, %70, %cst_33 [1] : vector<2x8xf32> to vector<2xf32>
    %72 = vector.shape_cast %71 : vector<2xf32> to vector<2x1xf32>
    %c0_34 = arith.constant 0 : index
    %c0_35 = arith.constant 0 : index
    %c0_36 = arith.constant 0 : index
    %73 = vector.load %arg4[%c0_34, %c0_35, %c0_36] : memref<2x2x1xf32, #tpu.memory_space<vmem>>, vector<1x2x1xf32>
    %74 = vector.shape_cast %73 : vector<1x2x1xf32> to vector<2x1xf32>
    %75 = arith.addf %72, %74 : vector<2x1xf32>
    %cst_37 = arith.constant dense<0xFF800000> : vector<1xf32>
    %76 = vector.multi_reduction <maximumf>, %75, %cst_37 [0] : vector<2x1xf32> to vector<1xf32>
    %77 = vector.shape_cast %76 : vector<1xf32> to vector<1x1xf32>
    %78 = vector.broadcast %77 : vector<1x1xf32> to vector<2x1xf32>
    %79 = arith.subf %75, %78 : vector<2x1xf32>
    %80 = math.exp %79 : vector<2x1xf32>
    %cst_38 = arith.constant dense<0.000000e+00> : vector<1xf32>
    %81 = vector.multi_reduction <add>, %80, %cst_38 [0] : vector<2x1xf32> to vector<1xf32>
    %82 = vector.shape_cast %81 : vector<1xf32> to vector<1x1xf32>
    %83 = tpu.reciprocal %82 {approx = true} : vector<1x1xf32> -> vector<1x1xf32>
    %84 = vector.broadcast %83 : vector<1x1xf32> to vector<2x1xf32>
    %85 = arith.mulf %80, %84 : vector<2x1xf32>
    %86 = vector.broadcast %85 : vector<2x1xf32> to vector<2x256xf32>
    %87 = arith.mulf %86, %67 : vector<2x256xf32>
    %cst_39 = arith.constant dense<0.000000e+00> : vector<256xf32>
    %88 = vector.multi_reduction <add>, %87, %cst_39 [0] : vector<2x256xf32> to vector<256xf32>
    %89 = vector.shape_cast %88 : vector<256xf32> to vector<1x256xf32>
    %c1 = arith.constant 1 : index
    %c0_40 = arith.constant 0 : index
    %c0_41 = arith.constant 0 : index
    %90 = vector.load %arg1[%c1, %c0_40, %c0_41] : memref<2x2x128xf32, #tpu.memory_space<vmem>>, vector<1x2x128xf32>
    %91 = vector.shape_cast %90 : vector<1x2x128xf32> to vector<2x128xf32>
    %92 = arith.truncf %91 : vector<2x128xf32> to vector<2x128xbf16>
    %c0_42 = arith.constant 0 : index
    %c0_43 = arith.constant 0 : index
    %93 = vector.load %arg6[%c0_42, %c0_43] : memref<128x256xbf16, #tpu.memory_space<vmem>>, vector<128x256xbf16>
    %cst_44 = arith.constant dense<0.000000e+00> : vector<2x256xf32>
    %94 = tpu.matmul %92, %93, %cst_44 {dimension_numbers = #tpu.dot_dimension_numbers<[1], [0], [0], [1], [0, 0, 1, 1], [], []>} : vector<2x128xbf16>, vector<128x256xbf16>, vector<2x256xf32> -> vector<2x256xf32>
    %c0_45 = arith.constant 0 : index
    %c0_46 = arith.constant 0 : index
    %95 = vector.load %arg9[%c0_45, %c0_46] : memref<1x256xf32, #tpu.memory_space<vmem>>, vector<1x256xf32>
    %96 = vector.broadcast %95 : vector<1x256xf32> to vector<2x256xf32>
    %97 = arith.addf %94, %96 : vector<2x256xf32>
    %98 = vector.extract_strided_slice %15 {offsets = [1, 0, 0], sizes = [1, 8, 256], strides = [1, 1, 1]} : vector<2x8x256xf32> to vector<1x8x256xf32>
    %99 = vector.shape_cast %98 : vector<1x8x256xf32> to vector<8x256xf32>
    %cst_47 = arith.constant dense<0.000000e+00> : vector<2x8xf32>
    %100 = tpu.matmul %97, %99, %cst_47 {dimension_numbers = #tpu.dot_dimension_numbers<[1], [1], [0], [0], [0, 0, 1, 0], [], []>} : vector<2x256xf32>, vector<8x256xf32>, vector<2x8xf32> -> vector<2x8xf32>
    %cst_48 = arith.constant dense<0xFF800000> : vector<2xf32>
    %101 = vector.multi_reduction <maximumf>, %100, %cst_48 [1] : vector<2x8xf32> to vector<2xf32>
    %102 = vector.shape_cast %101 : vector<2xf32> to vector<2x1xf32>
    %c1_49 = arith.constant 1 : index
    %c0_50 = arith.constant 0 : index
    %c0_51 = arith.constant 0 : index
    %103 = vector.load %arg4[%c1_49, %c0_50, %c0_51] : memref<2x2x1xf32, #tpu.memory_space<vmem>>, vector<1x2x1xf32>
    %104 = vector.shape_cast %103 : vector<1x2x1xf32> to vector<2x1xf32>
    %105 = arith.addf %102, %104 : vector<2x1xf32>
    %cst_52 = arith.constant dense<0xFF800000> : vector<1xf32>
    %106 = vector.multi_reduction <maximumf>, %105, %cst_52 [0] : vector<2x1xf32> to vector<1xf32>
    %107 = vector.shape_cast %106 : vector<1xf32> to vector<1x1xf32>
    %108 = vector.broadcast %107 : vector<1x1xf32> to vector<2x1xf32>
    %109 = arith.subf %105, %108 : vector<2x1xf32>
    %110 = math.exp %109 : vector<2x1xf32>
    %cst_53 = arith.constant dense<0.000000e+00> : vector<1xf32>
    %111 = vector.multi_reduction <add>, %110, %cst_53 [0] : vector<2x1xf32> to vector<1xf32>
    %112 = vector.shape_cast %111 : vector<1xf32> to vector<1x1xf32>
    %113 = tpu.reciprocal %112 {approx = true} : vector<1x1xf32> -> vector<1x1xf32>
    %114 = vector.broadcast %113 : vector<1x1xf32> to vector<2x1xf32>
    %115 = arith.mulf %110, %114 : vector<2x1xf32>
    %116 = vector.broadcast %115 : vector<2x1xf32> to vector<2x256xf32>
    %117 = arith.mulf %116, %97 : vector<2x256xf32>
    %cst_54 = arith.constant dense<0.000000e+00> : vector<256xf32>
    %118 = vector.multi_reduction <add>, %117, %cst_54 [0] : vector<2x256xf32> to vector<256xf32>
    %119 = vector.shape_cast %118 : vector<256xf32> to vector<1x256xf32>
    %120 = tpu.concatenate %89, %119 in 0 : vector<1x256xf32>, vector<1x256xf32> -> vector<2x256xf32>
    %121 = tpu.concatenate %59, %120 in 1 : vector<2x256xf32>, vector<2x256xf32> -> vector<2x512xf32>
    tpu.wait_dma2 semaphore(%arg15 : memref<!tpu.dma_semaphore, #tpu.memory_space<semaphore_mem>>) src(%arg11 : memref<512x128xf32, #tpu.memory_space<any>>) dst(%arg14 : memref<512x128xf32, #tpu.memory_space<vmem>>)
    %c0_55 = arith.constant 0 : index
    %c0_56 = arith.constant 0 : index
    %122 = vector.load %arg14[%c0_55, %c0_56] : memref<512x128xf32, #tpu.memory_space<vmem>>, vector<512x128xf32>
    %cst_57 = arith.constant dense<0.000000e+00> : vector<2x128xf32>
    %123 = tpu.matmul %121, %122, %cst_57 {dimension_numbers = #tpu.dot_dimension_numbers<[1], [0], [0], [1], [0, 0, 1, 1], [], []>} : vector<2x512xf32>, vector<512x128xf32>, vector<2x128xf32> -> vector<2x128xf32>
    %c0_58 = arith.constant 0 : index
    %c0_59 = arith.constant 0 : index
    %124 = vector.load %arg12[%c0_58, %c0_59] : memref<1x128xf32, #tpu.memory_space<vmem>>, vector<1x128xf32>
    %125 = vector.broadcast %124 : vector<1x128xf32> to vector<2x128xf32>
    %126 = arith.addf %123, %125 : vector<2x128xf32>
    %cst_60 = arith.constant 0.000000e+00 : f32
    %127 = vector.broadcast %cst_60 : f32 to vector<2x128xf32>
    %128 = arith.maximumf %126, %127 : vector<2x128xf32>
    %c0_61 = arith.constant 0 : index
    %c0_62 = arith.constant 0 : index
    %129 = vector.load %arg13[%c0_61, %c0_62] : memref<2x128xf32, #tpu.memory_space<vmem>>, vector<2x128xf32>
    tpu.vector_store %arg13[%c0_61, %c0_62], %128 {strides = array<i32>} : memref<2x128xf32, #tpu.memory_space<vmem>>, vector<2x128xf32>,
    return
  }
}

</mosaic_0001>

<llo_original>
// kernel: bivision_forward.1
$region0: #{bivision_forward.1}
  #allocation0 [shape = 'u32[]', space=smem, size = 0x4, offset = 0x4, fixed_abs, tag = 'smem constant byte address 0x4 - core index']
  #allocation1 [shape = 'u32[144,128]{1,0:T(1,128)}', space=vmem, size = 0x12000, scoped, tag = 'internal scratch']
  #allocation2 [shape = 'f32[512,128]{1,0:T(8,128)}', space=vmem, size = 0x40000, scoped, tag = 'scratch operand']
  #allocation3 [shape = 's32[1]{0}', space=sflag, size = 0x4, scoped, tag = 'scratch operand']
  #allocation13 [shape = 's32[]', space=sflag, size = 0x4, offset = 0, fixed_abs, tag = 'sflag constant byte address 0x0 - dummy sync flag']
  #allocation14 [shape = 's32[]', space=sflag, size = 0x4, offset = 0, fixed_abs, tag = 'sflag constant byte address 0x0 - dummy sync flag']
  #allocation15 [shape = 'u32[]', space=smem, size = 0x4, offset = 0x44, fixed_abs, tag = 'smem constant byte address 0x44 - assertion arg 0']
  #allocation16 [shape = 'u32[]', space=smem, size = 0x4, offset = 0x48, fixed_abs, tag = 'smem constant byte address 0x48 - assertion arg 1']
  %s0 = inlined_call_operand.hbm [shape: f32[32,128], index: 0, kind: input, shape index: {}]
  %s1 = inlined_call_operand.vmem [shape: f32[2,2,128], index: 1, kind: input, shape index: {}]
  %s2 = inlined_call_operand.vmem [shape: f32[16,128], index: 2, kind: input, shape index: {}]
  %s3 = inlined_call_operand.vmem [shape: f32[2,16], index: 3, kind: input, shape index: {}]
  %s4 = inlined_call_operand.vmem [shape: f32[2,2,1], index: 4, kind: input, shape index: {}]
  %s5 = inlined_call_operand.hbm [shape: bf16[128,256], index: 5, kind: input, shape index: {}]
  %s6 = inlined_call_operand.hbm [shape: bf16[128,256], index: 6, kind: input, shape index: {}]
  %s7 = inlined_call_operand.hbm [shape: bf16[128,256], index: 7, kind: input, shape index: {}]
  %s8 = inlined_call_operand.vmem [shape: f32[1,256], index: 8, kind: input, shape index: {}]
  %s9 = inlined_call_operand.vmem [shape: f32[1,256], index: 9, kind: input, shape index: {}]
  %s10 = inlined_call_operand.vmem [shape: f32[1,256], index: 10, kind: input, shape index: {}]
  %s11 = inlined_call_operand.hbm [shape: f32[512,128], index: 11, kind: input, shape index: {}]
  %s12 = inlined_call_operand.vmem [shape: f32[1,128], index: 12, kind: input, shape index: {}]
  %s13 = inlined_call_operand.hbm [shape: f32[2,128], index: 13, kind: output, shape index: {}]
  %s14 = sld [smem:[#allocation0]]
  $region78: #{bivision_forward.1} parent=0
    _
  %s16 = ssub.s32 1, %s14
  %s17 = scalar_select 0, %s16, %s14
  $region1: #{bivision_forward.1} parent=0
    #allocation4 [shape = 'u8[16384]{0}', space=vmem, size = 0x4000, scoped, tag = 'input window, operand 0, single buffered']
    #allocation5 [shape = 's32[1]{0}', space=sflag, size = 0x4, scoped, tag = 'scoped memory for bivision_forward.1']
    #allocation6 [shape = 's32[1]{0}', space=sflag, size = 0x4, scoped, tag = 'scoped memory for bivision_forward.1']
    #allocation7 [shape = 'u8[65536]{0}', space=vmem, size = 0x10000, scoped, tag = 'input window, operand 5, single buffered']
    #allocation8 [shape = 's32[1]{0}', space=sflag, size = 0x4, scoped, tag = 'scoped memory for bivision_forward.1']
    #allocation9 [shape = 'u8[65536]{0}', space=vmem, size = 0x10000, scoped, tag = 'input window, operand 6, single buffered']
    #allocation10 [shape = 'u8[65536]{0}', space=vmem, size = 0x10000, scoped, tag = 'input window, operand 7, single buffered']
    #allocation11 [shape = 's32[1]{0}', space=sflag, size = 0x4, scoped, tag = 'scoped memory for bivision_forward.1']
    #allocation12 [shape = 'u8[1024]{0}', space=vmem, size = 0x400, scoped, tag = 'output window, operand 0, single buffered']
    %18 = vsyncpa [#allocation5], 0
    %19 = vsyncpa [#allocation8], 0
    %20 = vsyncpa [#allocation11], 0
    %21 = vsyncpa [#allocation6], 0
    // Predicated region
    $region2: #{bivision_forward.1} parent=1 // pred_check
      _
    $region3: #{bivision_forward.1} parent=1 // pred_check_branch
      %23 = sbr.rel (0) target = $region5
    $region4: #{bivision_forward.1} parent=1 // pred_region
      %s25 = ssub.s32 512, 512
      %26 = vsyncadd [#allocation5], %s25
      %s27 = sshll.u32 [#allocation4], 4
      %s28 = int_to_ptr.vmem [resolvable:$true] %s27
      %33 = dma.hbm_to_vmem [thread:$0]  %s0, 512, %s28, [#allocation5], 128, 128, 8
    $region5: #{bivision_forward.1} parent=1 // pred_fallthru
      _
    // Predicated region
    $region6: #{bivision_forward.1} parent=1 // pred_check
      _
    $region7: #{bivision_forward.1} parent=1 // pred_check_branch
      %35 = sbr.rel (0) target = $region9
    $region8: #{bivision_forward.1} parent=1 // pred_region
      _
    $region9: #{bivision_forward.1} parent=1 // pred_fallthru
      _
    // Predicated region
    $region10: #{bivision_forward.1} parent=1 // pred_check
      _
    $region11: #{bivision_forward.1} parent=1 // pred_check_branch
      %37 = sbr.rel (0) target = $region13
    $region12: #{bivision_forward.1} parent=1 // pred_region
      _
    $region13: #{bivision_forward.1} parent=1 // pred_fallthru
      _
    // Predicated region
    $region14: #{bivision_forward.1} parent=1 // pred_check
      _
    $region15: #{bivision_forward.1} parent=1 // pred_check_branch
      %39 = sbr.rel (0) target = $region17
    $region16: #{bivision_forward.1} parent=1 // pred_region
      _
    $region17: #{bivision_forward.1} parent=1 // pred_fallthru
      _
    // Predicated region
    $region18: #{bivision_forward.1} parent=1 // pred_check
      _
    $region19: #{bivision_forward.1} parent=1 // pred_check_branch
      %41 = sbr.rel (0) target = $region21
    $region20: #{bivision_forward.1} parent=1 // pred_region
      _
    $region21: #{bivision_forward.1} parent=1 // pred_fallthru
      _
    // Predicated region
    $region22: #{bivision_forward.1} parent=1 // pred_check
      _
    $region23: #{bivision_forward.1} parent=1 // pred_check_branch
      %43 = sbr.rel (0) target = $region25
    $region24: #{bivision_forward.1} parent=1 // pred_region
      %s45 = ssub.s32 2048, 2048
      %46 = vsyncadd [#allocation8], %s45
      %s47 = sshll.u32 [#allocation7], 4
      %s48 = int_to_ptr.vmem [resolvable:$true] %s47
      %53 = dma.hbm_to_vmem [thread:$0]  %s5, 2048, %s48, [#allocation8], 128, 128, 8
    $region25: #{bivision_forward.1} parent=1 // pred_fallthru
      _
    // Predicated region
    $region26: #{bivision_forward.1} parent=1 // pred_check
      _
    $region27: #{bivision_forward.1} parent=1 // pred_check_branch
      %55 = sbr.rel (0) target = $region29
    $region28: #{bivision_forward.1} parent=1 // pred_region
      %s57 = ssub.s32 2048, 2048
      %58 = vsyncadd [#allocation8], %s57
      %s59 = sshll.u32 [#allocation9], 4
      %s60 = int_to_ptr.vmem [resolvable:$true] %s59
      %65 = dma.hbm_to_vmem [thread:$0]  %s6, 2048, %s60, [#allocation8], 128, 128, 8
    $region29: #{bivision_forward.1} parent=1 // pred_fallthru
      _
    // Predicated region
    $region30: #{bivision_forward.1} parent=1 // pred_check
      _
    $region31: #{bivision_forward.1} parent=1 // pred_check_branch
      %67 = sbr.rel (0) target = $region33
    $region32: #{bivision_forward.1} parent=1 // pred_region
      %s69 = ssub.s32 2048, 2048
      %70 = vsyncadd [#allocation11], %s69
      %s71 = sshll.u32 [#allocation10], 4
      %s72 = int_to_ptr.vmem [resolvable:$true] %s71
      %77 = dma.hbm_to_vmem [thread:$0]  %s7, 2048, %s72, [#allocation11], 128, 128, 8
    $region33: #{bivision_forward.1} parent=1 // pred_fallthru
      _
    // Predicated region
    $region34: #{bivision_forward.1} parent=1 // pred_check
      _
    $region35: #{bivision_forward.1} parent=1 // pred_check_branch
      %79 = sbr.rel (0) target = $region37
    $region36: #{bivision_forward.1} parent=1 // pred_region
      _
    $region37: #{bivision_forward.1} parent=1 // pred_fallthru
      _
    // Predicated region
    $region38: #{bivision_forward.1} parent=1 // pred_check
      _
    $region39: #{bivision_forward.1} parent=1 // pred_check_branch
      %81 = sbr.rel (0) target = $region41
    $region40: #{bivision_forward.1} parent=1 // pred_region
      _
    $region41: #{bivision_forward.1} parent=1 // pred_fallthru
      _
    // Predicated region
    $region42: #{bivision_forward.1} parent=1 // pred_check
      _
    $region43: #{bivision_forward.1} parent=1 // pred_check_branch
      %83 = sbr.rel (0) target = $region45
    $region44: #{bivision_forward.1} parent=1 // pred_region
      _
    $region45: #{bivision_forward.1} parent=1 // pred_fallthru
      _
    // Predicated region
    $region46: #{bivision_forward.1} parent=1 // pred_check
      _
    $region47: #{bivision_forward.1} parent=1 // pred_check_branch
      %85 = sbr.rel (0) target = $region49
    $region48: #{bivision_forward.1} parent=1 // pred_region
      _
    $region49: #{bivision_forward.1} parent=1 // pred_fallthru
      _
    // Predicated region
    $region50: #{bivision_forward.1} parent=1 // pred_check
      _
    $region51: #{bivision_forward.1} parent=1 // pred_check_branch
      %87 = sbr.rel (0) target = $region53
    $region52: #{bivision_forward.1} parent=1 // pred_region
      %88 = dma.done [#allocation5], 512
    $region53: #{bivision_forward.1} parent=1 // pred_fallthru
      _
    // Predicated region
    $region54: #{bivision_forward.1} parent=1 // pred_check
      _
    $region55: #{bivision_forward.1} parent=1 // pred_check_branch
      %90 = sbr.rel (0) target = $region57
    $region56: #{bivision_forward.1} parent=1 // pred_region
      %91 = dma.done [#allocation8], 2048
    $region57: #{bivision_forward.1} parent=1 // pred_fallthru
      _
    // Predicated region
    $region58: #{bivision_forward.1} parent=1 // pred_check
      _
    $region59: #{bivision_forward.1} parent=1 // pred_check_branch
      %93 = sbr.rel (0) target = $region61
    $region60: #{bivision_forward.1} parent=1 // pred_region
      %94 = dma.done [#allocation8], 2048
    $region61: #{bivision_forward.1} parent=1 // pred_fallthru
      _
    // Predicated region
    $region62: #{bivision_forward.1} parent=1 // pred_check
      _
    $region63: #{bivision_forward.1} parent=1 // pred_check_branch
      %96 = sbr.rel (0) target = $region65
    $region64: #{bivision_forward.1} parent=1 // pred_region
      %97 = dma.done [#allocation11], 2048
    $region65: #{bivision_forward.1} parent=1 // pred_fallthru
      _
    // Predicated region
    $region66: #{bivision_forward.1} parent=1 // pred_check
      _
    $region67: #{bivision_forward.1} parent=1 // pred_check_branch
      %100 = sbr.rel target = $region69
    $region68: #{bivision_forward.1} parent=1 // pred_region
      %101 = sst [smem:[#allocation15]] [#allocation14]
      %102 = sst [smem:[#allocation16]] [#allocation13]
    $region69: #{bivision_forward.1} parent=1 // pred_fallthru
      _
    %104 = shalt.err (0)
    %s106 = sshll.u32 [#allocation2], 4
    %s107 = int_to_ptr.vmem [resolvable:$true] %s106
    %109 = dma.hbm_to_vmem [thread:$0]  %s11, 8192, %s107, [#allocation3]
    %v110 = vld [vmem:[#allocation4] sm:$0xff]
    %v111 = vld [vmem:[#allocation4 + $0x8] sm:$0xff]
    %v112 = vld [vmem:[#allocation4 + $0x10] sm:$0xff]
    %v113 = vld [vmem:[#allocation4 + $0x18] sm:$0xff]
    %v114 = vpack.c.bf16 %v111, %v110
    %v115 = vpack.c.bf16 %v113, %v112
    %v116 = vld [vmem:[#allocation7] sm:$0xff]
    %v117 = vld [vmem:[#allocation7 + $0x8] sm:$0xff]
    %v118 = vld [vmem:[#allocation7 + $0x10] sm:$0xff]
    %v119 = vld [vmem:[#allocation7 + $0x18] sm:$0xff]
    %v120 = vld [vmem:[#allocation7 + $0x20] sm:$0xff]
    %v121 = vld [vmem:[#allocation7 + $0x28] sm:$0xff]
    %v122 = vld [vmem:[#allocation7 + $0x30] sm:$0xff]
    %v123 = vld [vmem:[#allocation7 + $0x38] sm:$0xff]
    %v124 = vld [vmem:[#allocation7 + $0x40] sm:$0xff]
    %v125 = vld [vmem:[#allocation7 + $0x48] sm:$0xff]
    %v126 = vld [vmem:[#allocation7 + $0x50] sm:$0xff]
    %v127 = vld [vmem:[#allocation7 + $0x58] sm:$0xff]
    %v128 = vld [vmem:[#allocation7 + $0x60] sm:$0xff]
    %v129 = vld [vmem:[#allocation7 + $0x68] sm:$0xff]
    %v130 = vld [vmem:[#allocation7 + $0x70] sm:$0xff]
    %v131 = vld [vmem:[#allocation7 + $0x78] sm:$0xff]
    %v132 = vld [vmem:[%s8] sm:$0x3]
    %v134 = vlaneseq
    %v135 = vshrl.u32 %v134, 7
    %v136 = vsub.s32 0, %v135
    %v137 = vrot.slane %v132, %v136
    %v138 = vlaneseq
    %v139 = vshrl.u32 %v138, 7
    %v140 = vsub.s32 1, %v139
    %v141 = vrot.slane %v132, %v140
    %v160 = vunpack.c.l.b16 %v116
    %v161 = vunpack.c.h.b16 %v116
    %v162 = vunpack.c.l.b16 %v117
    %v163 = vunpack.c.h.b16 %v117
    %v164 = vunpack.c.l.b16 %v118
    %v165 = vunpack.c.h.b16 %v118
    %v166 = vunpack.c.l.b16 %v119
    %v167 = vunpack.c.h.b16 %v119
    %v168 = vunpack.c.l.b16 %v120
    %v169 = vunpack.c.h.b16 %v120
    %v170 = vunpack.c.l.b16 %v121
    %v171 = vunpack.c.h.b16 %v121
    %v172 = vunpack.c.l.b16 %v122
    %v173 = vunpack.c.h.b16 %v122
    %v174 = vunpack.c.l.b16 %v123
    %v175 = vunpack.c.h.b16 %v123
    %v176 = vunpack.c.l.b16 %v124
    %v177 = vunpack.c.h.b16 %v124
    %v178 = vunpack.c.l.b16 %v125
    %v179 = vunpack.c.h.b16 %v125
    %v180 = vunpack.c.l.b16 %v126
    %v181 = vunpack.c.h.b16 %v126
    %v182 = vunpack.c.l.b16 %v127
    %v183 = vunpack.c.h.b16 %v127
    %v184 = vunpack.c.l.b16 %v128
    %v185 = vunpack.c.h.b16 %v128
    %v186 = vunpack.c.l.b16 %v129
    %v187 = vunpack.c.h.b16 %v129
    %v188 = vunpack.c.l.b16 %v130
    %v189 = vunpack.c.h.b16 %v130
    %v190 = vunpack.c.l.b16 %v131
    %v191 = vunpack.c.h.b16 %v131
    %v192 = vpack.c.b16 %v162, %v160
    %v193 = vpack.c.b16 %v163, %v161
    %v194 = vpack.c.b16 %v166, %v164
    %v195 = vpack.c.b16 %v167, %v165
    %v196 = vpack.c.b16 %v170, %v168
    %v197 = vpack.c.b16 %v171, %v169
    %v198 = vpack.c.b16 %v174, %v172
    %v199 = vpack.c.b16 %v175, %v173
    %v200 = vpack.c.b16 %v178, %v176
    %v201 = vpack.c.b16 %v179, %v177
    %v202 = vpack.c.b16 %v182, %v180
    %v203 = vpack.c.b16 %v183, %v181
    %v204 = vpack.c.b16 %v186, %v184
    %v205 = vpack.c.b16 %v187, %v185
    %v206 = vpack.c.b16 %v190, %v188
    %v207 = vpack.c.b16 %v191, %v189
    %224 = vmatprep.subr.bf16.mxu0 %v193
    %225 = vmatpush1.bf16.msra.mxu0 %v192
    %226 = vmatprep.subr.bf16.mxu0 %v195
    %227 = vmatpush1.bf16.msra.mxu0 %v194
    %228 = vmatprep.subr.bf16.mxu0 %v197
    %229 = vmatpush1.bf16.msra.mxu0 %v196
    %230 = vmatprep.subr.bf16.mxu0 %v199
    %231 = vmatpush1.bf16.msra.mxu0 %v198
    %232 = vmatprep.subr.bf16.mxu0 %v201
    %233 = vmatpush1.bf16.msra.mxu0 %v200
    %234 = vmatprep.subr.bf16.mxu0 %v203
    %235 = vmatpush1.bf16.msra.mxu0 %v202
    %236 = vmatprep.subr.bf16.mxu0 %v205
    %237 = vmatpush1.bf16.msra.mxu0 %v204
    %238 = vmatprep.subr.bf16.mxu0 %v207
    %239 = vmatpush1.bf16.msra.mxu0 %v206
    %240 = vmatprep.subr.bf16.mxu0 0
    %241 = vmatpush1.bf16.msra.mxu0 0
    %242 = vmatprep.subr.bf16.mxu0 0
    %243 = vmatpush1.bf16.msra.mxu0 0
    %244 = vmatprep.subr.bf16.mxu0 0
    %245 = vmatpush1.bf16.msra.mxu0 0
    %246 = vmatprep.subr.bf16.mxu0 0
    %247 = vmatpush1.bf16.msra.mxu0 0
    %248 = vmatprep.subr.bf16.mxu0 0
    %249 = vmatpush1.bf16.msra.mxu0 0
    %250 = vmatprep.subr.bf16.mxu0 0
    %251 = vmatpush1.bf16.msra.mxu0 0
    %252 = vmatprep.subr.bf16.mxu0 0
    %253 = vmatpush1.bf16.msra.mxu0 0
    %254 = vmatprep.subr.bf16.mxu0 0
    %255 = vmatpush1.bf16.msra.mxu0 0
    %256 = vmatprep.mubr.bf16.mxu0 0
    %257 = vmatmul.mubr.bf16.gmra.mrb[0].mxu0 %v114
    %v258 = vpop.f32.mrb[0].mxu0
    %v259 = vadd.f32 %v137, %v258
    %v260 = vpop.f32.mrb[0].mxu0
    %v261 = vadd.f32 %v141, %v260
    %v262 = vpop.f32.mrb[0].mxu0
    %v263 = vadd.f32 %v137, %v262
    %v264 = vpop.f32.mrb[0].mxu0
    %v265 = vadd.f32 %v141, %v264
    %266 = vmatprep.mubr.bf16.mxu0 0
    %267 = vmatmul.mubr.bf16.gmra.mrb[0].mxu0 %v115
    %v268 = vpop.f32.mrb[0].mxu0
    %v269 = vadd.f32 %v137, %v268
    %v270 = vpop.f32.mrb[0].mxu0
    %v271 = vadd.f32 %v141, %v270
    %v272 = vpop.f32.mrb[0].mxu0
    %v273 = vadd.f32 %v137, %v272
    %v274 = vpop.f32.mrb[0].mxu0
    %v275 = vadd.f32 %v141, %v274
    %276 = vdwg.mxu0
    %v277 = vld [vmem:[%s2] sm:$0xff]
    %v278 = vld [vmem:[%s2 + $0x8] sm:$0xff]
    %v279 = vpack.c.bf16 %v278, %v277
    %v280 = vld [vmem:[#allocation10] sm:$0xff]
    %v281 = vld [vmem:[#allocation10 + $0x8] sm:$0xff]
    %v282 = vld [vmem:[#allocation10 + $0x10] sm:$0xff]
    %v283 = vld [vmem:[#allocation10 + $0x18] sm:$0xff]
    %v284 = vld [vmem:[#allocation10 + $0x20] sm:$0xff]
    %v285 = vld [vmem:[#allocation10 + $0x28] sm:$0xff]
    %v286 = vld [vmem:[#allocation10 + $0x30] sm:$0xff]
    %v287 = vld [vmem:[#allocation10 + $0x38] sm:$0xff]
    %v288 = vld [vmem:[#allocation10 + $0x40] sm:$0xff]
    %v289 = vld [vmem:[#allocation10 + $0x48] sm:$0xff]
    %v290 = vld [vmem:[#allocation10 + $0x50] sm:$0xff]
    %v291 = vld [vmem:[#allocation10 + $0x58] sm:$0xff]
    %v292 = vld [vmem:[#allocation10 + $0x60] sm:$0xff]
    %v293 = vld [vmem:[#allocation10 + $0x68] sm:$0xff]
    %v294 = vld [vmem:[#allocation10 + $0x70] sm:$0xff]
    %v295 = vld [vmem:[#allocation10 + $0x78] sm:$0xff]
    %v296 = vld [vmem:[%s10] sm:$0x3]
    %v298 = vlaneseq
    %v299 = vshrl.u32 %v298, 7
    %v300 = vsub.s32 0, %v299
    %v301 = vrot.slane %v296, %v300
    %v302 = vlaneseq
    %v303 = vshrl.u32 %v302, 7
    %v304 = vsub.s32 1, %v303
    %v305 = vrot.slane %v296, %v304
    %v324 = vunpack.c.l.b16 %v280
    %v325 = vunpack.c.h.b16 %v280
    %v326 = vunpack.c.l.b16 %v281
    %v327 = vunpack.c.h.b16 %v281
    %v328 = vunpack.c.l.b16 %v282
    %v329 = vunpack.c.h.b16 %v282
    %v330 = vunpack.c.l.b16 %v283
    %v331 = vunpack.c.h.b16 %v283
    %v332 = vunpack.c.l.b16 %v284
    %v333 = vunpack.c.h.b16 %v284
    %v334 = vunpack.c.l.b16 %v285
    %v335 = vunpack.c.h.b16 %v285
    %v336 = vunpack.c.l.b16 %v286
    %v337 = vunpack.c.h.b16 %v286
    %v338 = vunpack.c.l.b16 %v287
    %v339 = vunpack.c.h.b16 %v287
    %v340 = vunpack.c.l.b16 %v288
    %v341 = vunpack.c.h.b16 %v288
    %v342 = vunpack.c.l.b16 %v289
    %v343 = vunpack.c.h.b16 %v289
    %v344 = vunpack.c.l.b16 %v290
    %v345 = vunpack.c.h.b16 %v290
    %v346 = vunpack.c.l.b16 %v291
    %v347 = vunpack.c.h.b16 %v291
    %v348 = vunpack.c.l.b16 %v292
    %v349 = vunpack.c.h.b16 %v292
    %v350 = vunpack.c.l.b16 %v293
    %v351 = vunpack.c.h.b16 %v293
    %v352 = vunpack.c.l.b16 %v294
    %v353 = vunpack.c.h.b16 %v294
    %v354 = vunpack.c.l.b16 %v295
    %v355 = vunpack.c.h.b16 %v295
    %v356 = vpack.c.b16 %v326, %v324
    %v357 = vpack.c.b16 %v327, %v325
    %v358 = vpack.c.b16 %v330, %v328
    %v359 = vpack.c.b16 %v331, %v329
    %v360 = vpack.c.b16 %v334, %v332
    %v361 = vpack.c.b16 %v335, %v333
    %v362 = vpack.c.b16 %v338, %v336
    %v363 = vpack.c.b16 %v339, %v337
    %v364 = vpack.c.b16 %v342, %v340
    %v365 = vpack.c.b16 %v343, %v341
    %v366 = vpack.c.b16 %v346, %v344
    %v367 = vpack.c.b16 %v347, %v345
    %v368 = vpack.c.b16 %v350, %v348
    %v369 = vpack.c.b16 %v351, %v349
    %v370 = vpack.c.b16 %v354, %v352
    %v371 = vpack.c.b16 %v355, %v353
    %388 = vmatprep.subr.bf16.mxu0 %v357
    %389 = vmatpush1.bf16.msra.mxu0 %v356
    %390 = vmatprep.subr.bf16.mxu0 %v359
    %391 = vmatpush1.bf16.msra.mxu0 %v358
    %392 = vmatprep.subr.bf16.mxu0 %v361
    %393 = vmatpush1.bf16.msra.mxu0 %v360
    %394 = vmatprep.subr.bf16.mxu0 %v363
    %395 = vmatpush1.bf16.msra.mxu0 %v362
    %396 = vmatprep.subr.bf16.mxu0 %v365
    %397 = vmatpush1.bf16.msra.mxu0 %v364
    %398 = vmatprep.subr.bf16.mxu0 %v367
    %399 = vmatpush1.bf16.msra.mxu0 %v366
    %400 = vmatprep.subr.bf16.mxu0 %v369
    %401 = vmatpush1.bf16.msra.mxu0 %v368
    %402 = vmatprep.subr.bf16.mxu0 %v371
    %403 = vmatpush1.bf16.msra.mxu0 %v370
    %404 = vmatprep.subr.bf16.mxu0 0
    %405 = vmatpush1.bf16.msra.mxu0 0
    %406 = vmatprep.subr.bf16.mxu0 0
    %407 = vmatpush1.bf16.msra.mxu0 0
    %408 = vmatprep.subr.bf16.mxu0 0
    %409 = vmatpush1.bf16.msra.mxu0 0
    %410 = vmatprep.subr.bf16.mxu0 0
    %411 = vmatpush1.bf16.msra.mxu0 0
    %412 = vmatprep.subr.bf16.mxu0 0
    %413 = vmatpush1.bf16.msra.mxu0 0
    %414 = vmatprep.subr.bf16.mxu0 0
    %415 = vmatpush1.bf16.msra.mxu0 0
    %416 = vmatprep.subr.bf16.mxu0 0
    %417 = vmatpush1.bf16.msra.mxu0 0
    %418 = vmatprep.subr.bf16.mxu0 0
    %419 = vmatpush1.bf16.msra.mxu0 0
    %420 = vmatprep.mubr.bf16.mxu0 0
    %421 = vmatmul.mubr.bf16.gmra.mrb[0].mxu0 %v279
    %v422 = vpop.f32.mrb[0].mxu0
    %v423 = vadd.f32 %v301, %v422
    %v424 = vpop.f32.mrb[0].mxu0
    %v425 = vadd.f32 %v305, %v424
    %v426 = vpop.f32.mrb[0].mxu0
    %v427 = vadd.f32 %v301, %v426
    %v428 = vpop.f32.mrb[0].mxu0
    %v429 = vadd.f32 %v305, %v428
    %430 = vdwg.mxu0
    %431 = vmatprep.subr.mxu0 %v261
    %432 = vmatpush1.xpose.msra.mxu0 %v259
    %433 = vmatprep.subr.mxu0 %v265
    %434 = vmatpush1.xpose.msra.mxu0 %v263
    %435 = vmatprep.subr.mxu0 0.0
    %436 = vmatpush1.xpose.msra.mxu0 0.0
    %437 = vmatprep.subr.mxu0 0.0
    %438 = vmatpush1.xpose.msra.mxu0 0.0
    %439 = vmatprep.subr.mxu0 0.0
    %440 = vmatpush1.xpose.msra.mxu0 0.0
    %441 = vmatprep.subr.mxu0 0.0
    %442 = vmatpush1.xpose.msra.mxu0 0.0
    %443 = vmatprep.subr.mxu0 0.0
    %444 = vmatpush1.xpose.msra.mxu0 0.0
    %445 = vmatprep.subr.mxu0 0.0
    %446 = vmatpush1.xpose.msra.mxu0 0.0
    %447 = vmatprep.subr.mxu0 0.0
    %448 = vmatpush1.xpose.msra.mxu0 0.0
    %449 = vmatprep.subr.mxu0 0.0
    %450 = vmatpush1.xpose.msra.mxu0 0.0
    %451 = vmatprep.subr.mxu0 0.0
    %452 = vmatpush1.xpose.msra.mxu0 0.0
    %453 = vmatprep.subr.mxu0 0.0
    %454 = vmatpush1.xpose.msra.mxu0 0.0
    %455 = vmatprep.subr.mxu0 0.0
    %456 = vmatpush1.xpose.msra.mxu0 0.0
    %457 = vmatprep.subr.mxu0 0.0
    %458 = vmatpush1.xpose.msra.mxu0 0.0
    %459 = vmatprep.subr.mxu0 0.0
    %460 = vmatpush1.xpose.msra.mxu0 0.0
    %461 = vmatprep.subr.mxu0 0.0
    %462 = vmatpush1.xpose.msra.mxu0 0.0
    %463 = vmatprep.subr.mxu0 0.0
    %464 = vmatpush1.xpose.msra.mxu0 0.0
    %465 = vmatprep.subr.mxu0 0.0
    %466 = vmatpush1.xpose.msra.mxu0 0.0
    %467 = vmatprep.subr.mxu0 0.0
    %468 = vmatpush1.xpose.msra.mxu0 0.0
    %469 = vmatprep.subr.mxu0 0.0
    %470 = vmatpush1.xpose.msra.mxu0 0.0
    %471 = vmatprep.subr.mxu0 0.0
    %472 = vmatpush1.xpose.msra.mxu0 0.0
    %473 = vmatprep.subr.mxu0 0.0
    %474 = vmatpush1.xpose.msra.mxu0 0.0
    %475 = vmatprep.subr.mxu0 0.0
    %476 = vmatpush1.xpose.msra.mxu0 0.0
    %477 = vmatprep.subr.mxu0 0.0
    %478 = vmatpush1.xpose.msra.mxu0 0.0
    %479 = vmatprep.subr.mxu0 0.0
    %480 = vmatpush1.xpose.msra.mxu0 0.0
    %481 = vmatprep.subr.mxu0 0.0
    %482 = vmatpush1.xpose.msra.mxu0 0.0
    %483 = vmatprep.subr.mxu0 0.0
    %484 = vmatpush1.xpose.msra.mxu0 0.0
    %485 = vmatprep.subr.mxu0 0.0
    %486 = vmatpush1.xpose.msra.mxu0 0.0
    %487 = vmatprep.subr.mxu0 0.0
    %488 = vmatpush1.xpose.msra.mxu0 0.0
    %489 = vmatprep.subr.mxu0 0.0
    %490 = vmatpush1.xpose.msra.mxu0 0.0
    %491 = vmatprep.subr.mxu0 0.0
    %492 = vmatpush1.xpose.msra.mxu0 0.0
    %493 = vmatprep.subr.mxu0 0.0
    %494 = vmatpush1.xpose.msra.mxu0 0.0
    %495 = vmatprep.mubr.f32.mxu0 %v425
    %496 = vmatmul.mubr.f32.gmra.mrb[0].mxu0 %v423
    %v497 = vpop.f32.mrb[0].mxu0
    %v498 = vadd.f32 0.0, %v497
    %v499 = vpop.f32.mrb[0].mxu0
    %500 = vdwg.mxu0
    %501 = vmatprep.subr.mxu0 %v271
    %502 = vmatpush1.xpose.msra.mxu0 %v269
    %503 = vmatprep.subr.mxu0 %v275
    %504 = vmatpush1.xpose.msra.mxu0 %v273
    %505 = vmatprep.subr.mxu0 0.0
    %506 = vmatpush1.xpose.msra.mxu0 0.0
    %507 = vmatprep.subr.mxu0 0.0
    %508 = vmatpush1.xpose.msra.mxu0 0.0
    %509 = vmatprep.subr.mxu0 0.0
    %510 = vmatpush1.xpose.msra.mxu0 0.0
    %511 = vmatprep.subr.mxu0 0.0
    %512 = vmatpush1.xpose.msra.mxu0 0.0
    %513 = vmatprep.subr.mxu0 0.0
    %514 = vmatpush1.xpose.msra.mxu0 0.0
    %515 = vmatprep.subr.mxu0 0.0
    %516 = vmatpush1.xpose.msra.mxu0 0.0
    %517 = vmatprep.subr.mxu0 0.0
    %518 = vmatpush1.xpose.msra.mxu0 0.0
    %519 = vmatprep.subr.mxu0 0.0
    %520 = vmatpush1.xpose.msra.mxu0 0.0
    %521 = vmatprep.subr.mxu0 0.0
    %522 = vmatpush1.xpose.msra.mxu0 0.0
    %523 = vmatprep.subr.mxu0 0.0
    %524 = vmatpush1.xpose.msra.mxu0 0.0
    %525 = vmatprep.subr.mxu0 0.0
    %526 = vmatpush1.xpose.msra.mxu0 0.0
    %527 = vmatprep.subr.mxu0 0.0
    %528 = vmatpush1.xpose.msra.mxu0 0.0
    %529 = vmatprep.subr.mxu0 0.0
    %530 = vmatpush1.xpose.msra.mxu0 0.0
    %531 = vmatprep.subr.mxu0 0.0
    %532 = vmatpush1.xpose.msra.mxu0 0.0
    %533 = vmatprep.subr.mxu0 0.0
    %534 = vmatpush1.xpose.msra.mxu0 0.0
    %535 = vmatprep.subr.mxu0 0.0
    %536 = vmatpush1.xpose.msra.mxu0 0.0
    %537 = vmatprep.subr.mxu0 0.0
    %538 = vmatpush1.xpose.msra.mxu0 0.0
    %539 = vmatprep.subr.mxu0 0.0
    %540 = vmatpush1.xpose.msra.mxu0 0.0
    %541 = vmatprep.subr.mxu0 0.0
    %542 = vmatpush1.xpose.msra.mxu0 0.0
    %543 = vmatprep.subr.mxu0 0.0
    %544 = vmatpush1.xpose.msra.mxu0 0.0
    %545 = vmatprep.subr.mxu0 0.0
    %546 = vmatpush1.xpose.msra.mxu0 0.0
    %547 = vmatprep.subr.mxu0 0.0
    %548 = vmatpush1.xpose.msra.mxu0 0.0
    %549 = vmatprep.subr.mxu0 0.0
    %550 = vmatpush1.xpose.msra.mxu0 0.0
    %551 = vmatprep.subr.mxu0 0.0
    %552 = vmatpush1.xpose.msra.mxu0 0.0
    %553 = vmatprep.subr.mxu0 0.0
    %554 = vmatpush1.xpose.msra.mxu0 0.0
    %555 = vmatprep.subr.mxu0 0.0
    %556 = vmatpush1.xpose.msra.mxu0 0.0
    %557 = vmatprep.subr.mxu0 0.0
    %558 = vmatpush1.xpose.msra.mxu0 0.0
    %559 = vmatprep.subr.mxu0 0.0
    %560 = vmatpush1.xpose.msra.mxu0 0.0
    %561 = vmatprep.subr.mxu0 0.0
    %562 = vmatpush1.xpose.msra.mxu0 0.0
    %563 = vmatprep.subr.mxu0 0.0
    %564 = vmatpush1.xpose.msra.mxu0 0.0
    %565 = vmatprep.mubr.f32.mxu0 %v429
    %566 = vmatmul.mubr.f32.gmra.mrb[0].mxu0 %v427
    %v567 = vpop.f32.mrb[0].mxu0
    %v568 = vadd.f32 0.0, %v567
    %v569 = vpop.f32.mrb[0].mxu0
    %570 = vdwg.mxu0
    %vm571 = vcmask 130048
    %v572 = vsel %vm571, %v498, -inf
    %v573 = vrot.slane %v572, 4
    %v574 = vmax.f32 %v572, %v573
    %v575 = vrot.slane %v574, 2
    %v576 = vmax.f32 %v574, %v575
    %v577 = vrot.slane %v576, 1
    %v578 = vmax.f32 %v576, %v577
    %v579 = vsel %vm571, %v568, -inf
    %v580 = vrot.slane %v579, 4
    %v581 = vmax.f32 %v579, %v580
    %v582 = vrot.slane %v581, 2
    %v583 = vmax.f32 %v581, %v582
    %v584 = vrot.slane %v583, 1
    %v585 = vmax.f32 %v583, %v584
    %v586 = vld [vmem:[%s3] sm:$0x3]
    %v588 = vrot.slane %v586, 1
    %v591 = vadd.f32 %v578, %v586
    %v592 = vadd.f32 %v585, %v588
    %v595 = vrot.slane %v592, 7
    %vm596 = vcmask 1041409
    %v597 = vsel %vm596, %v595, %v591
    %vm599 = vcmask 123904
    %v600 = vsel %vm599, %v597, -inf
    %601 = vmax.xlane.f32.xlu0 %v600
    %v602 = vpop.xlane.xlu0 %601
    %v604 = vrot.slane %v602, 1
    %v607 = vsub.f32 %v591, %v602
    %v608 = vsub.f32 %v592, %v604
    %v609 = vmul.f32 %v607, 1.442695
    %v610 = vpow.pop %v609
    %v611 = vmul.f32 %v608, 1.442695
    %v612 = vpow.pop %v611
    %v615 = vrot.slane %v612, 7
    %v616 = vsel %vm596, %v615, %v610
    %v618 = vsel %vm599, %v616, 0.0
    %619 = vadd.xlane.f32.xlu0 %v618
    %v620 = vpop.xlane.xlu0 %619
    %v621 = vrcp.pop %v620
    %v623 = vrot.slane %v621, 1
    %v626 = vmul.f32 %v610, %v621
    %v627 = vmul.f32 %v612, %v623
    %v628 = vlaneseq
    %v629 = vshrl.u32 %v628, 7
    %v630 = vadd.s32 %v629, 8
    %v631 = vlaneseq
    %v632 = vand.u32 %v631, 127
    %vm633 = vcmp.eq.s32.totalorder %v632, %v629
    %vm634 = vcmp.eq.s32.totalorder %v632, %v630
    %v635 = vsel %vm633, 1, 0
    %v636 = vsel %vm634, 1, 0
    %v637 = vcvt.s32.f32 %v635
    %v638 = vcvt.s32.f32 %v636
    %v639 = vadd.f32 %v637, 0.0
    %v640 = vadd.f32 %v638, 0.0
    %v641 = vadd.s32 %v629, 16
    %v642 = vadd.s32 %v630, 16
    %vm643 = vcmp.eq.s32.totalorder %v632, %v641
    %vm644 = vcmp.eq.s32.totalorder %v632, %v642
    %v645 = vsel %vm643, 1, 0
    %v646 = vsel %vm644, 1, 0
    %v647 = vcvt.s32.f32 %v645
    %v648 = vcvt.s32.f32 %v646
    %v649 = vadd.f32 %v639, %v647
    %v650 = vadd.f32 %v640, %v648
    %v653 = vrot.slane %v627, 7
    %v654 = vsel %vm596, %v653, %v626
    %v655 = vsel %vm571, %v654, 0
    %657 = vmatprep.subr.mxu0 0.0
    %658 = vmatpush1.msra.mxu0 %v649
    %659 = vmatprep.subr.mxu0 0.0
    %660 = vmatpush1.msra.mxu0 %v650
    %661 = vmatprep.subr.mxu0 0.0
    %662 = vmatpush1.msra.mxu0 0.0
    %663 = vmatprep.subr.mxu0 0.0
    %664 = vmatpush1.msra.mxu0 0.0
    %665 = vmatprep.subr.mxu0 0.0
    %666 = vmatpush1.msra.mxu0 0.0
    %667 = vmatprep.subr.mxu0 0.0
    %668 = vmatpush1.msra.mxu0 0.0
    %669 = vmatprep.subr.mxu0 0.0
    %670 = vmatpush1.msra.mxu0 0.0
    %671 = vmatprep.subr.mxu0 0.0
    %672 = vmatpush1.msra.mxu0 0.0
    %673 = vmatprep.subr.mxu0 0.0
    %674 = vmatpush1.msra.mxu0 0.0
    %675 = vmatprep.subr.mxu0 0.0
    %676 = vmatpush1.msra.mxu0 0.0
    %677 = vmatprep.subr.mxu0 0.0
    %678 = vmatpush1.msra.mxu0 0.0
    %679 = vmatprep.subr.mxu0 0.0
    %680 = vmatpush1.msra.mxu0 0.0
    %681 = vmatprep.subr.mxu0 0.0
    %682 = vmatpush1.msra.mxu0 0.0
    %683 = vmatprep.subr.mxu0 0.0
    %684 = vmatpush1.msra.mxu0 0.0
    %685 = vmatprep.subr.mxu0 0.0
    %686 = vmatpush1.msra.mxu0 0.0
    %687 = vmatprep.subr.mxu0 0.0
    %688 = vmatpush1.msra.mxu0 0.0
    %689 = vmatprep.subr.mxu0 0.0
    %690 = vmatpush1.msra.mxu0 0.0
    %691 = vmatprep.subr.mxu0 0.0
    %692 = vmatpush1.msra.mxu0 0.0
    %693 = vmatprep.subr.mxu0 0.0
    %694 = vmatpush1.msra.mxu0 0.0
    %695 = vmatprep.subr.mxu0 0.0
    %696 = vmatpush1.msra.mxu0 0.0
    %697 = vmatprep.subr.mxu0 0.0
    %698 = vmatpush1.msra.mxu0 0.0
    %699 = vmatprep.subr.mxu0 0.0
    %700 = vmatpush1.msra.mxu0 0.0
    %701 = vmatprep.subr.mxu0 0.0
    %702 = vmatpush1.msra.mxu0 0.0
    %703 = vmatprep.subr.mxu0 0.0
    %704 = vmatpush1.msra.mxu0 0.0
    %705 = vmatprep.subr.mxu0 0.0
    %706 = vmatpush1.msra.mxu0 0.0
    %707 = vmatprep.subr.mxu0 0.0
    %708 = vmatpush1.msra.mxu0 0.0
    %709 = vmatprep.subr.mxu0 0.0
    %710 = vmatpush1.msra.mxu0 0.0
    %711 = vmatprep.subr.mxu0 0.0
    %712 = vmatpush1.msra.mxu0 0.0
    %713 = vmatprep.subr.mxu0 0.0
    %714 = vmatpush1.msra.mxu0 0.0
    %715 = vmatprep.subr.mxu0 0.0
    %716 = vmatpush1.msra.mxu0 0.0
    %717 = vmatprep.subr.mxu0 0.0
    %718 = vmatpush1.msra.mxu0 0.0
    %719 = vmatprep.subr.mxu0 0.0
    %720 = vmatpush1.msra.mxu0 0.0
    %721 = vmatprep.mubr.f32.mxu0 0.0
    %722 = vmatmul.mubr.f32.gmra.mrb[0].mxu0 %v655
    %v723 = vpop.f32.mrb[0].mxu0
    %v724 = vadd.f32 0.0, %v723
    %v725 = vpop.f32.mrb[0].mxu0
    %726 = vdwg.mxu0
    %v727 = vmul.u32 %v629, 16
    %vm728 = vcmp.ge.s32.totalorder %v632, %v727
    %v729 = vadd.s32 %v629, 1
    %v730 = vmul.u32 %v729, 16
    %vm731 = vcmp.lt.s32.totalorder %v632, %v730
    %vm732 = vmand %vm728, %vm731
    %v733 = vsel %vm732, %v724, 0.0
    %vm734 = vcmask 261120
    %v736 = vsel %vm734, %v733, 0
    %738 = vmatprep.subr.mxu0 %v261
    %739 = vmatpush1.msra.mxu0 %v259
    %740 = vmatprep.subr.mxu0 %v265
    %741 = vmatpush1.msra.mxu0 %v263
    %742 = vmatprep.subr.mxu0 %v271
    %743 = vmatpush1.msra.mxu0 %v269
    %744 = vmatprep.subr.mxu0 %v275
    %745 = vmatpush1.msra.mxu0 %v273
    %746 = vmatprep.subr.mxu0 0.0
    %747 = vmatpush1.msra.mxu0 0.0
    %748 = vmatprep.subr.mxu0 0.0
    %749 = vmatpush1.msra.mxu0 0.0
    %750 = vmatprep.subr.mxu0 0.0
    %751 = vmatpush1.msra.mxu0 0.0
    %752 = vmatprep.subr.mxu0 0.0
    %753 = vmatpush1.msra.mxu0 0.0
    %754 = vmatprep.subr.mxu0 0.0
    %755 = vmatpush1.msra.mxu0 0.0
    %756 = vmatprep.subr.mxu0 0.0
    %757 = vmatpush1.msra.mxu0 0.0
    %758 = vmatprep.subr.mxu0 0.0
    %759 = vmatpush1.msra.mxu0 0.0
    %760 = vmatprep.subr.mxu0 0.0
    %761 = vmatpush1.msra.mxu0 0.0
    %762 = vmatprep.subr.mxu0 0.0
    %763 = vmatpush1.msra.mxu0 0.0
    %764 = vmatprep.subr.mxu0 0.0
    %765 = vmatpush1.msra.mxu0 0.0
    %766 = vmatprep.subr.mxu0 0.0
    %767 = vmatpush1.msra.mxu0 0.0
    %768 = vmatprep.subr.mxu0 0.0
    %769 = vmatpush1.msra.mxu0 0.0
    %770 = vmatprep.subr.mxu0 0.0
    %771 = vmatpush1.msra.mxu0 0.0
    %772 = vmatprep.subr.mxu0 0.0
    %773 = vmatpush1.msra.mxu0 0.0
    %774 = vmatprep.subr.mxu0 0.0
    %775 = vmatpush1.msra.mxu0 0.0
    %776 = vmatprep.subr.mxu0 0.0
    %777 = vmatpush1.msra.mxu0 0.0
    %778 = vmatprep.subr.mxu0 0.0
    %779 = vmatpush1.msra.mxu0 0.0
    %780 = vmatprep.subr.mxu0 0.0
    %781 = vmatpush1.msra.mxu0 0.0
    %782 = vmatprep.subr.mxu0 0.0
    %783 = vmatpush1.msra.mxu0 0.0
    %784 = vmatprep.subr.mxu0 0.0
    %785 = vmatpush1.msra.mxu0 0.0
    %786 = vmatprep.subr.mxu0 0.0
    %787 = vmatpush1.msra.mxu0 0.0
    %788 = vmatprep.subr.mxu0 0.0
    %789 = vmatpush1.msra.mxu0 0.0
    %790 = vmatprep.subr.mxu0 0.0
    %791 = vmatpush1.msra.mxu0 0.0
    %792 = vmatprep.subr.mxu0 0.0
    %793 = vmatpush1.msra.mxu0 0.0
    %794 = vmatprep.subr.mxu0 0.0
    %795 = vmatpush1.msra.mxu0 0.0
    %796 = vmatprep.subr.mxu0 0.0
    %797 = vmatpush1.msra.mxu0 0.0
    %798 = vmatprep.subr.mxu0 0.0
    %799 = vmatpush1.msra.mxu0 0.0
    %800 = vmatprep.subr.mxu0 0.0
    %801 = vmatpush1.msra.mxu0 0.0
    %802 = vmatprep.mubr.f32.mxu0 0.0
    %803 = vmatmul.mubr.f32.gmra.mrb[0].mxu0 %v736
    %v804 = vpop.f32.mrb[0].mxu0
    %v805 = vadd.f32 0.0, %v804
    %v806 = vpop.f32.mrb[0].mxu0
    %v807 = vadd.f32 0.0, %v806
    %808 = vdwg.mxu0
    %v809 = vld [vmem:[%s1] sm:$0x3]
    %v810 = vpack.c.bf16 %v809, %v809
    %v811 = vld [vmem:[#allocation9] sm:$0xff]
    %v812 = vld [vmem:[#allocation9 + $0x8] sm:$0xff]
    %v813 = vld [vmem:[#allocation9 + $0x10] sm:$0xff]
    %v814 = vld [vmem:[#allocation9 + $0x18] sm:$0xff]
    %v815 = vld [vmem:[#allocation9 + $0x20] sm:$0xff]
    %v816 = vld [vmem:[#allocation9 + $0x28] sm:$0xff]
    %v817 = vld [vmem:[#allocation9 + $0x30] sm:$0xff]
    %v818 = vld [vmem:[#allocation9 + $0x38] sm:$0xff]
    %v819 = vld [vmem:[#allocation9 + $0x40] sm:$0xff]
    %v820 = vld [vmem:[#allocation9 + $0x48] sm:$0xff]
    %v821 = vld [vmem:[#allocation9 + $0x50] sm:$0xff]
    %v822 = vld [vmem:[#allocation9 + $0x58] sm:$0xff]
    %v823 = vld [vmem:[#allocation9 + $0x60] sm:$0xff]
    %v824 = vld [vmem:[#allocation9 + $0x68] sm:$0xff]
    %v825 = vld [vmem:[#allocation9 + $0x70] sm:$0xff]
    %v826 = vld [vmem:[#allocation9 + $0x78] sm:$0xff]
    %v827 = vld [vmem:[%s9] sm:$0x3]
    %v829 = vlaneseq
    %v830 = vshrl.u32 %v829, 7
    %v831 = vsub.s32 0, %v830
    %v832 = vrot.slane %v827, %v831
    %v833 = vlaneseq
    %v834 = vshrl.u32 %v833, 7
    %v835 = vsub.s32 1, %v834
    %v836 = vrot.slane %v827, %v835
    %v855 = vunpack.c.l.b16 %v811
    %v856 = vunpack.c.h.b16 %v811
    %v857 = vunpack.c.l.b16 %v812
    %v858 = vunpack.c.h.b16 %v812
    %v859 = vunpack.c.l.b16 %v813
    %v860 = vunpack.c.h.b16 %v813
    %v861 = vunpack.c.l.b16 %v814
    %v862 = vunpack.c.h.b16 %v814
    %v863 = vunpack.c.l.b16 %v815
    %v864 = vunpack.c.h.b16 %v815
    %v865 = vunpack.c.l.b16 %v816
    %v866 = vunpack.c.h.b16 %v816
    %v867 = vunpack.c.l.b16 %v817
    %v868 = vunpack.c.h.b16 %v817
    %v869 = vunpack.c.l.b16 %v818
    %v870 = vunpack.c.h.b16 %v818
    %v871 = vunpack.c.l.b16 %v819
    %v872 = vunpack.c.h.b16 %v819
    %v873 = vunpack.c.l.b16 %v820
    %v874 = vunpack.c.h.b16 %v820
    %v875 = vunpack.c.l.b16 %v821
    %v876 = vunpack.c.h.b16 %v821
    %v877 = vunpack.c.l.b16 %v822
    %v878 = vunpack.c.h.b16 %v822
    %v879 = vunpack.c.l.b16 %v823
    %v880 = vunpack.c.h.b16 %v823
    %v881 = vunpack.c.l.b16 %v824
    %v882 = vunpack.c.h.b16 %v824
    %v883 = vunpack.c.l.b16 %v825
    %v884 = vunpack.c.h.b16 %v825
    %v885 = vunpack.c.l.b16 %v826
    %v886 = vunpack.c.h.b16 %v826
    %v887 = vpack.c.b16 %v857, %v855
    %v888 = vpack.c.b16 %v858, %v856
    %v889 = vpack.c.b16 %v861, %v859
    %v890 = vpack.c.b16 %v862, %v860
    %v891 = vpack.c.b16 %v865, %v863
    %v892 = vpack.c.b16 %v866, %v864
    %v893 = vpack.c.b16 %v869, %v867
    %v894 = vpack.c.b16 %v870, %v868
    %v895 = vpack.c.b16 %v873, %v871
    %v896 = vpack.c.b16 %v874, %v872
    %v897 = vpack.c.b16 %v877, %v875
    %v898 = vpack.c.b16 %v878, %v876
    %v899 = vpack.c.b16 %v881, %v879
    %v900 = vpack.c.b16 %v882, %v880
    %v901 = vpack.c.b16 %v885, %v883
    %v902 = vpack.c.b16 %v886, %v884
    %919 = vmatprep.subr.bf16.mxu0 %v888
    %920 = vmatpush1.bf16.msra.mxu0 %v887
    %921 = vmatprep.subr.bf16.mxu0 %v890
    %922 = vmatpush1.bf16.msra.mxu0 %v889
    %923 = vmatprep.subr.bf16.mxu0 %v892
    %924 = vmatpush1.bf16.msra.mxu0 %v891
    %925 = vmatprep.subr.bf16.mxu0 %v894
    %926 = vmatpush1.bf16.msra.mxu0 %v893
    %927 = vmatprep.subr.bf16.mxu0 %v896
    %928 = vmatpush1.bf16.msra.mxu0 %v895
    %929 = vmatprep.subr.bf16.mxu0 %v898
    %930 = vmatpush1.bf16.msra.mxu0 %v897
    %931 = vmatprep.subr.bf16.mxu0 %v900
    %932 = vmatpush1.bf16.msra.mxu0 %v899
    %933 = vmatprep.subr.bf16.mxu0 %v902
    %934 = vmatpush1.bf16.msra.mxu0 %v901
    %935 = vmatprep.subr.bf16.mxu0 0
    %936 = vmatpush1.bf16.msra.mxu0 0
    %937 = vmatprep.subr.bf16.mxu0 0
    %938 = vmatpush1.bf16.msra.mxu0 0
    %939 = vmatprep.subr.bf16.mxu0 0
    %940 = vmatpush1.bf16.msra.mxu0 0
    %941 = vmatprep.subr.bf16.mxu0 0
    %942 = vmatpush1.bf16.msra.mxu0 0
    %943 = vmatprep.subr.bf16.mxu0 0
    %944 = vmatpush1.bf16.msra.mxu0 0
    %945 = vmatprep.subr.bf16.mxu0 0
    %946 = vmatpush1.bf16.msra.mxu0 0
    %947 = vmatprep.subr.bf16.mxu0 0
    %948 = vmatpush1.bf16.msra.mxu0 0
    %949 = vmatprep.subr.bf16.mxu0 0
    %950 = vmatpush1.bf16.msra.mxu0 0
    %951 = vmatprep.mubr.bf16.mxu0 0
    %952 = vmatmul.mubr.bf16.gmra.mrb[0].mxu0 %v810
    %v953 = vpop.f32.mrb[0].mxu0
    %v954 = vadd.f32 %v832, %v953
    %v955 = vpop.f32.mrb[0].mxu0
    %v956 = vadd.f32 %v836, %v955
    %v957 = vpop.f32.mrb[0].mxu0
    %v958 = vpop.f32.mrb[0].mxu0
    %959 = vdwg.mxu0
    %960 = vmatprep.subr.mxu0 %v425
    %961 = vmatpush1.xpose.msra.mxu0 %v423
    %962 = vmatprep.subr.mxu0 0.0
    %963 = vmatpush1.xpose.msra.mxu0 0.0
    %964 = vmatprep.subr.mxu0 0.0
    %965 = vmatpush1.xpose.msra.mxu0 0.0
    %966 = vmatprep.subr.mxu0 0.0
    %967 = vmatpush1.xpose.msra.mxu0 0.0
    %968 = vmatprep.subr.mxu0 0.0
    %969 = vmatpush1.xpose.msra.mxu0 0.0
    %970 = vmatprep.subr.mxu0 0.0
    %971 = vmatpush1.xpose.msra.mxu0 0.0
    %972 = vmatprep.subr.mxu0 0.0
    %973 = vmatpush1.xpose.msra.mxu0 0.0
    %974 = vmatprep.subr.mxu0 0.0
    %975 = vmatpush1.xpose.msra.mxu0 0.0
    %976 = vmatprep.subr.mxu0 0.0
    %977 = vmatpush1.xpose.msra.mxu0 0.0
    %978 = vmatprep.subr.mxu0 0.0
    %979 = vmatpush1.xpose.msra.mxu0 0.0
    %980 = vmatprep.subr.mxu0 0.0
    %981 = vmatpush1.xpose.msra.mxu0 0.0
    %982 = vmatprep.subr.mxu0 0.0
    %983 = vmatpush1.xpose.msra.mxu0 0.0
    %984 = vmatprep.subr.mxu0 0.0
    %985 = vmatpush1.xpose.msra.mxu0 0.0
    %986 = vmatprep.subr.mxu0 0.0
    %987 = vmatpush1.xpose.msra.mxu0 0.0
    %988 = vmatprep.subr.mxu0 0.0
    %989 = vmatpush1.xpose.msra.mxu0 0.0
    %990 = vmatprep.subr.mxu0 0.0
    %991 = vmatpush1.xpose.msra.mxu0 0.0
    %992 = vmatprep.subr.mxu0 0.0
    %993 = vmatpush1.xpose.msra.mxu0 0.0
    %994 = vmatprep.subr.mxu0 0.0
    %995 = vmatpush1.xpose.msra.mxu0 0.0
    %996 = vmatprep.subr.mxu0 0.0
    %997 = vmatpush1.xpose.msra.mxu0 0.0
    %998 = vmatprep.subr.mxu0 0.0
    %999 = vmatpush1.xpose.msra.mxu0 0.0
    %1000 = vmatprep.subr.mxu0 0.0
    %1001 = vmatpush1.xpose.msra.mxu0 0.0
    %1002 = vmatprep.subr.mxu0 0.0
    %1003 = vmatpush1.xpose.msra.mxu0 0.0
    %1004 = vmatprep.subr.mxu0 0.0
    %1005 = vmatpush1.xpose.msra.mxu0 0.0
    %1006 = vmatprep.subr.mxu0 0.0
    %1007 = vmatpush1.xpose.msra.mxu0 0.0
    %1008 = vmatprep.subr.mxu0 0.0
    %1009 = vmatpush1.xpose.msra.mxu0 0.0
    %1010 = vmatprep.subr.mxu0 0.0
    %1011 = vmatpush1.xpose.msra.mxu0 0.0
    %1012 = vmatprep.subr.mxu0 0.0
    %1013 = vmatpush1.xpose.msra.mxu0 0.0
    %1014 = vmatprep.subr.mxu0 0.0
    %1015 = vmatpush1.xpose.msra.mxu0 0.0
    %1016 = vmatprep.subr.mxu0 0.0
    %1017 = vmatpush1.xpose.msra.mxu0 0.0
    %1018 = vmatprep.subr.mxu0 0.0
    %1019 = vmatpush1.xpose.msra.mxu0 0.0
    %1020 = vmatprep.subr.mxu0 0.0
    %1021 = vmatpush1.xpose.msra.mxu0 0.0
    %1022 = vmatprep.subr.mxu0 0.0
    %1023 = vmatpush1.xpose.msra.mxu0 0.0
    %1024 = vmatprep.mubr.f32.mxu0 %v956
    %1025 = vmatmul.mubr.f32.gmra.mrb[0].mxu0 %v954
    %v1026 = vpop.f32.mrb[0].mxu0
    %v1027 = vadd.f32 0.0, %v1026
    %v1028 = vpop.f32.mrb[0].mxu0
    %1029 = vdwg.mxu0
    %vm1030 = vcmask 58368
    %v1031 = vsel %vm1030, %v1027, -inf
    %1032 = vmax.xlane.f32.xlu0 %v1031
    %v1033 = vpop.xlane.xlu0 %1032
    %v1034 = vld [vmem:[%s4] sm:$0x3]
    %v1035 = vadd.f32 %v1033, %v1034
    %vm1036 = vcmask 1024
    %v1037 = vsel %vm1036, %v1035, -inf
    %v1038 = vrot.slane %v1037, 4
    %v1039 = vmax.f32 %v1037, %v1038
    %v1040 = vrot.slane %v1039, 2
    %v1041 = vmax.f32 %v1039, %v1040
    %v1042 = vrot.slane %v1041, 1
    %v1043 = vmax.f32 %v1041, %v1042
    %v1044 = vsub.f32 %v1035, %v1043
    %v1045 = vmul.f32 %v1044, 1.442695
    %v1046 = vpow.pop %v1045
    %v1047 = vsel %vm1036, %v1046, 0.0
    %v1048 = vrot.slane %v1047, 4
    %v1049 = vadd.f32 %v1047, %v1048
    %v1050 = vrot.slane %v1049, 2
    %v1051 = vadd.f32 %v1049, %v1050
    %v1052 = vrot.slane %v1051, 1
    %v1053 = vadd.f32 %v1051, %v1052
    %v1054 = vrcp.pop %v1053
    %v1055 = vmul.f32 %v1046, %v1054
    %1057 = vset.pattern.permute.xlu0 0
    %1058 = vperm.xlu0 %1057, %v1055
    %v1059 = vpop.permute.xlu0 %1058
    %v1061 = vmul.f32 %v1059, %v954
    %v1062 = vmul.f32 %v1059, %v956
    %vm1063 = vcmask 1041408
    %v1064 = vsel %vm1063, %v1061, 0.0
    %v1065 = vrot.slane %v1064, 4
    %v1066 = vadd.f32 %v1064, %v1065
    %v1067 = vrot.slane %v1066, 2
    %v1068 = vadd.f32 %v1066, %v1067
    %v1069 = vrot.slane %v1068, 1
    %v1070 = vadd.f32 %v1068, %v1069
    %v1071 = vsel %vm1063, %v1062, 0.0
    %v1072 = vrot.slane %v1071, 4
    %v1073 = vadd.f32 %v1071, %v1072
    %v1074 = vrot.slane %v1073, 2
    %v1075 = vadd.f32 %v1073, %v1074
    %v1076 = vrot.slane %v1075, 1
    %v1077 = vadd.f32 %v1075, %v1076
    %s1078 = scalar_lea.vmem %s1, 2
    %v1079 = vld [vmem:[%s1078] sm:$0x3]
    %v1080 = vpack.c.bf16 %v1079, %v1079
    %1081 = vmatprep.subr.bf16.mxu0 %v888
    %1082 = vmatpush1.bf16.msra.mxu0 %v887
    %1083 = vmatprep.subr.bf16.mxu0 %v890
    %1084 = vmatpush1.bf16.msra.mxu0 %v889
    %1085 = vmatprep.subr.bf16.mxu0 %v892
    %1086 = vmatpush1.bf16.msra.mxu0 %v891
    %1087 = vmatprep.subr.bf16.mxu0 %v894
    %1088 = vmatpush1.bf16.msra.mxu0 %v893
    %1089 = vmatprep.subr.bf16.mxu0 %v896
    %1090 = vmatpush1.bf16.msra.mxu0 %v895
    %1091 = vmatprep.subr.bf16.mxu0 %v898
    %1092 = vmatpush1.bf16.msra.mxu0 %v897
    %1093 = vmatprep.subr.bf16.mxu0 %v900
    %1094 = vmatpush1.bf16.msra.mxu0 %v899
    %1095 = vmatprep.subr.bf16.mxu0 %v902
    %1096 = vmatpush1.bf16.msra.mxu0 %v901
    %1097 = vmatprep.subr.bf16.mxu0 0
    %1098 = vmatpush1.bf16.msra.mxu0 0
    %1099 = vmatprep.subr.bf16.mxu0 0
    %1100 = vmatpush1.bf16.msra.mxu0 0
    %1101 = vmatprep.subr.bf16.mxu0 0
    %1102 = vmatpush1.bf16.msra.mxu0 0
    %1103 = vmatprep.subr.bf16.mxu0 0
    %1104 = vmatpush1.bf16.msra.mxu0 0
    %1105 = vmatprep.subr.bf16.mxu0 0
    %1106 = vmatpush1.bf16.msra.mxu0 0
    %1107 = vmatprep.subr.bf16.mxu0 0
    %1108 = vmatpush1.bf16.msra.mxu0 0
    %1109 = vmatprep.subr.bf16.mxu0 0
    %1110 = vmatpush1.bf16.msra.mxu0 0
    %1111 = vmatprep.subr.bf16.mxu0 0
    %1112 = vmatpush1.bf16.msra.mxu0 0
    %1113 = vmatprep.mubr.bf16.mxu0 0
    %1114 = vmatmul.mubr.bf16.gmra.mrb[0].mxu0 %v1080
    %v1115 = vpop.f32.mrb[0].mxu0
    %v1116 = vadd.f32 %v832, %v1115
    %v1117 = vpop.f32.mrb[0].mxu0
    %v1118 = vadd.f32 %v836, %v1117
    %v1119 = vpop.f32.mrb[0].mxu0
    %v1120 = vpop.f32.mrb[0].mxu0
    %1121 = vdwg.mxu0
    %1122 = vmatprep.subr.mxu0 %v429
    %1123 = vmatpush1.xpose.msra.mxu0 %v427
    %1124 = vmatprep.subr.mxu0 0.0
    %1125 = vmatpush1.xpose.msra.mxu0 0.0
    %1126 = vmatprep.subr.mxu0 0.0
    %1127 = vmatpush1.xpose.msra.mxu0 0.0
    %1128 = vmatprep.subr.mxu0 0.0
    %1129 = vmatpush1.xpose.msra.mxu0 0.0
    %1130 = vmatprep.subr.mxu0 0.0
    %1131 = vmatpush1.xpose.msra.mxu0 0.0
    %1132 = vmatprep.subr.mxu0 0.0
    %1133 = vmatpush1.xpose.msra.mxu0 0.0
    %1134 = vmatprep.subr.mxu0 0.0
    %1135 = vmatpush1.xpose.msra.mxu0 0.0
    %1136 = vmatprep.subr.mxu0 0.0
    %1137 = vmatpush1.xpose.msra.mxu0 0.0
    %1138 = vmatprep.subr.mxu0 0.0
    %1139 = vmatpush1.xpose.msra.mxu0 0.0
    %1140 = vmatprep.subr.mxu0 0.0
    %1141 = vmatpush1.xpose.msra.mxu0 0.0
    %1142 = vmatprep.subr.mxu0 0.0
    %1143 = vmatpush1.xpose.msra.mxu0 0.0
    %1144 = vmatprep.subr.mxu0 0.0
    %1145 = vmatpush1.xpose.msra.mxu0 0.0
    %1146 = vmatprep.subr.mxu0 0.0
    %1147 = vmatpush1.xpose.msra.mxu0 0.0
    %1148 = vmatprep.subr.mxu0 0.0
    %1149 = vmatpush1.xpose.msra.mxu0 0.0
    %1150 = vmatprep.subr.mxu0 0.0
    %1151 = vmatpush1.xpose.msra.mxu0 0.0
    %1152 = vmatprep.subr.mxu0 0.0
    %1153 = vmatpush1.xpose.msra.mxu0 0.0
    %1154 = vmatprep.subr.mxu0 0.0
    %1155 = vmatpush1.xpose.msra.mxu0 0.0
    %1156 = vmatprep.subr.mxu0 0.0
    %1157 = vmatpush1.xpose.msra.mxu0 0.0
    %1158 = vmatprep.subr.mxu0 0.0
    %1159 = vmatpush1.xpose.msra.mxu0 0.0
    %1160 = vmatprep.subr.mxu0 0.0
    %1161 = vmatpush1.xpose.msra.mxu0 0.0
    %1162 = vmatprep.subr.mxu0 0.0
    %1163 = vmatpush1.xpose.msra.mxu0 0.0
    %1164 = vmatprep.subr.mxu0 0.0
    %1165 = vmatpush1.xpose.msra.mxu0 0.0
    %1166 = vmatprep.subr.mxu0 0.0
    %1167 = vmatpush1.xpose.msra.mxu0 0.0
    %1168 = vmatprep.subr.mxu0 0.0
    %1169 = vmatpush1.xpose.msra.mxu0 0.0
    %1170 = vmatprep.subr.mxu0 0.0
    %1171 = vmatpush1.xpose.msra.mxu0 0.0
    %1172 = vmatprep.subr.mxu0 0.0
    %1173 = vmatpush1.xpose.msra.mxu0 0.0
    %1174 = vmatprep.subr.mxu0 0.0
    %1175 = vmatpush1.xpose.msra.mxu0 0.0
    %1176 = vmatprep.subr.mxu0 0.0
    %1177 = vmatpush1.xpose.msra.mxu0 0.0
    %1178 = vmatprep.subr.mxu0 0.0
    %1179 = vmatpush1.xpose.msra.mxu0 0.0
    %1180 = vmatprep.subr.mxu0 0.0
    %1181 = vmatpush1.xpose.msra.mxu0 0.0
    %1182 = vmatprep.subr.mxu0 0.0
    %1183 = vmatpush1.xpose.msra.mxu0 0.0
    %1184 = vmatprep.subr.mxu0 0.0
    %1185 = vmatpush1.xpose.msra.mxu0 0.0
    %1186 = vmatprep.mubr.f32.mxu0 %v1118
    %1187 = vmatmul.mubr.f32.gmra.mrb[0].mxu0 %v1116
    %v1188 = vpop.f32.mrb[0].mxu0
    %v1189 = vadd.f32 0.0, %v1188
    %v1190 = vpop.f32.mrb[0].mxu0
    %1191 = vdwg.mxu0
    %v1192 = vsel %vm1030, %v1189, -inf
    %1193 = vmax.xlane.f32.xlu0 %v1192
    %v1194 = vpop.xlane.xlu0 %1193
    %s1195 = scalar_lea.vmem %s4, 2
    %v1196 = vld [vmem:[%s1195] sm:$0x3]
    %v1197 = vadd.f32 %v1194, %v1196
    %v1198 = vsel %vm1036, %v1197, -inf
    %v1199 = vrot.slane %v1198, 4
    %v1200 = vmax.f32 %v1198, %v1199
    %v1201 = vrot.slane %v1200, 2
    %v1202 = vmax.f32 %v1200, %v1201
    %v1203 = vrot.slane %v1202, 1
    %v1204 = vmax.f32 %v1202, %v1203
    %v1205 = vsub.f32 %v1197, %v1204
    %v1206 = vmul.f32 %v1205, 1.442695
    %v1207 = vpow.pop %v1206
    %v1208 = vsel %vm1036, %v1207, 0.0
    %v1209 = vrot.slane %v1208, 4
    %v1210 = vadd.f32 %v1208, %v1209
    %v1211 = vrot.slane %v1210, 2
    %v1212 = vadd.f32 %v1210, %v1211
    %v1213 = vrot.slane %v1212, 1
    %v1214 = vadd.f32 %v1212, %v1213
    %v1215 = vrcp.pop %v1214
    %v1216 = vmul.f32 %v1207, %v1215
    %1218 = vset.pattern.permute.xlu0 0
    %1219 = vperm.xlu0 %1218, %v1216
    %v1220 = vpop.permute.xlu0 %1219
    %v1222 = vmul.f32 %v1220, %v1116
    %v1223 = vmul.f32 %v1220, %v1118
    %v1224 = vsel %vm1063, %v1222, 0.0
    %v1225 = vrot.slane %v1224, 4
    %v1226 = vadd.f32 %v1224, %v1225
    %v1227 = vrot.slane %v1226, 2
    %v1228 = vadd.f32 %v1226, %v1227
    %v1229 = vrot.slane %v1228, 1
    %v1230 = vadd.f32 %v1228, %v1229
    %v1231 = vsel %vm1063, %v1223, 0.0
    %v1232 = vrot.slane %v1231, 4
    %v1233 = vadd.f32 %v1231, %v1232
    %v1234 = vrot.slane %v1233, 2
    %v1235 = vadd.f32 %v1233, %v1234
    %v1236 = vrot.slane %v1235, 1
    %v1237 = vadd.f32 %v1235, %v1236
    %vm1238 = vcmask 1040384
    %v1239 = vsel %vm1238, %v1070, %v1230
    %v1240 = vsel %vm1238, %v1077, %v1237
    %s1241 = smul.u32 512, 1
    %s1242 = sshll.u32 %s1241, 4
    %1243 = dma.done [#allocation3], %s1242
    %v1244 = vld [vmem:[#allocation2] sm:$0xff]
    %v1245 = vld [vmem:[#allocation2 + $0x8] sm:$0xff]
    %v1246 = vld [vmem:[#allocation2 + $0x10] sm:$0xff]
    %v1247 = vld [vmem:[#allocation2 + $0x18] sm:$0xff]
    %v1248 = vld [vmem:[#allocation2 + $0x20] sm:$0xff]
    %v1249 = vld [vmem:[#allocation2 + $0x28] sm:$0xff]
    %v1250 = vld [vmem:[#allocation2 + $0x30] sm:$0xff]
    %v1251 = vld [vmem:[#allocation2 + $0x38] sm:$0xff]
    %v1252 = vld [vmem:[#allocation2 + $0x40] sm:$0xff]
    %v1253 = vld [vmem:[#allocation2 + $0x48] sm:$0xff]
    %v1254 = vld [vmem:[#allocation2 + $0x50] sm:$0xff]
    %v1255 = vld [vmem:[#allocation2 + $0x58] sm:$0xff]
    %v1256 = vld [vmem:[#allocation2 + $0x60] sm:$0xff]
    %v1257 = vld [vmem:[#allocation2 + $0x68] sm:$0xff]
    %v1258 = vld [vmem:[#allocation2 + $0x70] sm:$0xff]
    %v1259 = vld [vmem:[#allocation2 + $0x78] sm:$0xff]
    %v1260 = vld [vmem:[#allocation2 + $0x80] sm:$0xff]
    %v1261 = vld [vmem:[#allocation2 + $0x88] sm:$0xff]
    %v1262 = vld [vmem:[#allocation2 + $0x90] sm:$0xff]
    %v1263 = vld [vmem:[#allocation2 + $0x98] sm:$0xff]
    %v1264 = vld [vmem:[#allocation2 + $0xa0] sm:$0xff]
    %v1265 = vld [vmem:[#allocation2 + $0xa8] sm:$0xff]
    %v1266 = vld [vmem:[#allocation2 + $0xb0] sm:$0xff]
    %v1267 = vld [vmem:[#allocation2 + $0xb8] sm:$0xff]
    %v1268 = vld [vmem:[#allocation2 + $0xc0] sm:$0xff]
    %v1269 = vld [vmem:[#allocation2 + $0xc8] sm:$0xff]
    %v1270 = vld [vmem:[#allocation2 + $0xd0] sm:$0xff]
    %v1271 = vld [vmem:[#allocation2 + $0xd8] sm:$0xff]
    %v1272 = vld [vmem:[#allocation2 + $0xe0] sm:$0xff]
    %v1273 = vld [vmem:[#allocation2 + $0xe8] sm:$0xff]
    %v1274 = vld [vmem:[#allocation2 + $0xf0] sm:$0xff]
    %v1275 = vld [vmem:[#allocation2 + $0xf8] sm:$0xff]
    %v1276 = vld [vmem:[#allocation2 + $0x100] sm:$0xff]
    %v1277 = vld [vmem:[#allocation2 + $0x108] sm:$0xff]
    %v1278 = vld [vmem:[#allocation2 + $0x110] sm:$0xff]
    %v1279 = vld [vmem:[#allocation2 + $0x118] sm:$0xff]
    %v1280 = vld [vmem:[#allocation2 + $0x120] sm:$0xff]
    %v1281 = vld [vmem:[#allocation2 + $0x128] sm:$0xff]
    %v1282 = vld [vmem:[#allocation2 + $0x130] sm:$0xff]
    %v1283 = vld [vmem:[#allocation2 + $0x138] sm:$0xff]
    %v1284 = vld [vmem:[#allocation2 + $0x140] sm:$0xff]
    %v1285 = vld [vmem:[#allocation2 + $0x148] sm:$0xff]
    %v1286 = vld [vmem:[#allocation2 + $0x150] sm:$0xff]
    %v1287 = vld [vmem:[#allocation2 + $0x158] sm:$0xff]
    %v1288 = vld [vmem:[#allocation2 + $0x160] sm:$0xff]
    %v1289 = vld [vmem:[#allocation2 + $0x168] sm:$0xff]
    %v1290 = vld [vmem:[#allocation2 + $0x170] sm:$0xff]
    %v1291 = vld [vmem:[#allocation2 + $0x178] sm:$0xff]
    %v1292 = vld [vmem:[#allocation2 + $0x180] sm:$0xff]
    %v1293 = vld [vmem:[#allocation2 + $0x188] sm:$0xff]
    %v1294 = vld [vmem:[#allocation2 + $0x190] sm:$0xff]
    %v1295 = vld [vmem:[#allocation2 + $0x198] sm:$0xff]
    %v1296 = vld [vmem:[#allocation2 + $0x1a0] sm:$0xff]
    %v1297 = vld [vmem:[#allocation2 + $0x1a8] sm:$0xff]
    %v1298 = vld [vmem:[#allocation2 + $0x1b0] sm:$0xff]
    %v1299 = vld [vmem:[#allocation2 + $0x1b8] sm:$0xff]
    %v1300 = vld [vmem:[#allocation2 + $0x1c0] sm:$0xff]
    %v1301 = vld [vmem:[#allocation2 + $0x1c8] sm:$0xff]
    %v1302 = vld [vmem:[#allocation2 + $0x1d0] sm:$0xff]
    %v1303 = vld [vmem:[#allocation2 + $0x1d8] sm:$0xff]
    %v1304 = vld [vmem:[#allocation2 + $0x1e0] sm:$0xff]
    %v1305 = vld [vmem:[#allocation2 + $0x1e8] sm:$0xff]
    %v1306 = vld [vmem:[#allocation2 + $0x1f0] sm:$0xff]
    %v1307 = vld [vmem:[#allocation2 + $0x1f8] sm:$0xff]
    %v1308 = vld [vmem:[%s12] sm:$0x1]
    %v1310 = vlaneseq
    %v1311 = vshrl.u32 %v1310, 7
    %v1312 = vsub.s32 0, %v1311
    %v1313 = vrot.slane %v1308, %v1312
    %1315 = vmatprep.subr.mxu0 0.0
    %1316 = vmatpush1.msra.mxu0 %v1244
    %1317 = vmatprep.subr.mxu0 0.0
    %1318 = vmatpush1.msra.mxu0 %v1245
    %1319 = vmatprep.subr.mxu0 0.0
    %1320 = vmatpush1.msra.mxu0 %v1246
    %1321 = vmatprep.subr.mxu0 0.0
    %1322 = vmatpush1.msra.mxu0 %v1247
    %1323 = vmatprep.subr.mxu0 0.0
    %1324 = vmatpush1.msra.mxu0 %v1248
    %1325 = vmatprep.subr.mxu0 0.0
    %1326 = vmatpush1.msra.mxu0 %v1249
    %1327 = vmatprep.subr.mxu0 0.0
    %1328 = vmatpush1.msra.mxu0 %v1250
    %1329 = vmatprep.subr.mxu0 0.0
    %1330 = vmatpush1.msra.mxu0 %v1251
    %1331 = vmatprep.subr.mxu0 0.0
    %1332 = vmatpush1.msra.mxu0 %v1252
    %1333 = vmatprep.subr.mxu0 0.0
    %1334 = vmatpush1.msra.mxu0 %v1253
    %1335 = vmatprep.subr.mxu0 0.0
    %1336 = vmatpush1.msra.mxu0 %v1254
    %1337 = vmatprep.subr.mxu0 0.0
    %1338 = vmatpush1.msra.mxu0 %v1255
    %1339 = vmatprep.subr.mxu0 0.0
    %1340 = vmatpush1.msra.mxu0 %v1256
    %1341 = vmatprep.subr.mxu0 0.0
    %1342 = vmatpush1.msra.mxu0 %v1257
    %1343 = vmatprep.subr.mxu0 0.0
    %1344 = vmatpush1.msra.mxu0 %v1258
    %1345 = vmatprep.subr.mxu0 0.0
    %1346 = vmatpush1.msra.mxu0 %v1259
    %1347 = vmatprep.subr.mxu0 0.0
    %1348 = vmatpush1.msra.mxu0 %v1260
    %1349 = vmatprep.subr.mxu0 0.0
    %1350 = vmatpush1.msra.mxu0 %v1261
    %1351 = vmatprep.subr.mxu0 0.0
    %1352 = vmatpush1.msra.mxu0 %v1262
    %1353 = vmatprep.subr.mxu0 0.0
    %1354 = vmatpush1.msra.mxu0 %v1263
    %1355 = vmatprep.subr.mxu0 0.0
    %1356 = vmatpush1.msra.mxu0 %v1264
    %1357 = vmatprep.subr.mxu0 0.0
    %1358 = vmatpush1.msra.mxu0 %v1265
    %1359 = vmatprep.subr.mxu0 0.0
    %1360 = vmatpush1.msra.mxu0 %v1266
    %1361 = vmatprep.subr.mxu0 0.0
    %1362 = vmatpush1.msra.mxu0 %v1267
    %1363 = vmatprep.subr.mxu0 0.0
    %1364 = vmatpush1.msra.mxu0 %v1268
    %1365 = vmatprep.subr.mxu0 0.0
    %1366 = vmatpush1.msra.mxu0 %v1269
    %1367 = vmatprep.subr.mxu0 0.0
    %1368 = vmatpush1.msra.mxu0 %v1270
    %1369 = vmatprep.subr.mxu0 0.0
    %1370 = vmatpush1.msra.mxu0 %v1271
    %1371 = vmatprep.subr.mxu0 0.0
    %1372 = vmatpush1.msra.mxu0 %v1272
    %1373 = vmatprep.subr.mxu0 0.0
    %1374 = vmatpush1.msra.mxu0 %v1273
    %1375 = vmatprep.subr.mxu0 0.0
    %1376 = vmatpush1.msra.mxu0 %v1274
    %1377 = vmatprep.subr.mxu0 0.0
    %1378 = vmatpush1.msra.mxu0 %v1275
    %1379 = vmatprep.mubr.f32.mxu0 %v807
    %1380 = vmatmul.mubr.f32.gmra.mrb[0].mxu0 %v805
    %v1381 = vpop.f32.mrb[0].mxu0
    %v1382 = vadd.f32 %v1313, %v1381
    %v1383 = vpop.f32.mrb[0].mxu0
    %1384 = vdwg.mxu0
    %1385 = vmatprep.subr.mxu0 0.0
    %1386 = vmatpush1.msra.mxu0 %v1276
    %1387 = vmatprep.subr.mxu0 0.0
    %1388 = vmatpush1.msra.mxu0 %v1277
    %1389 = vmatprep.subr.mxu0 0.0
    %1390 = vmatpush1.msra.mxu0 %v1278
    %1391 = vmatprep.subr.mxu0 0.0
    %1392 = vmatpush1.msra.mxu0 %v1279
    %1393 = vmatprep.subr.mxu0 0.0
    %1394 = vmatpush1.msra.mxu0 %v1280
    %1395 = vmatprep.subr.mxu0 0.0
    %1396 = vmatpush1.msra.mxu0 %v1281
    %1397 = vmatprep.subr.mxu0 0.0
    %1398 = vmatpush1.msra.mxu0 %v1282
    %1399 = vmatprep.subr.mxu0 0.0
    %1400 = vmatpush1.msra.mxu0 %v1283
    %1401 = vmatprep.subr.mxu0 0.0
    %1402 = vmatpush1.msra.mxu0 %v1284
    %1403 = vmatprep.subr.mxu0 0.0
    %1404 = vmatpush1.msra.mxu0 %v1285
    %1405 = vmatprep.subr.mxu0 0.0
    %1406 = vmatpush1.msra.mxu0 %v1286
    %1407 = vmatprep.subr.mxu0 0.0
    %1408 = vmatpush1.msra.mxu0 %v1287
    %1409 = vmatprep.subr.mxu0 0.0
    %1410 = vmatpush1.msra.mxu0 %v1288
    %1411 = vmatprep.subr.mxu0 0.0
    %1412 = vmatpush1.msra.mxu0 %v1289
    %1413 = vmatprep.subr.mxu0 0.0
    %1414 = vmatpush1.msra.mxu0 %v1290
    %1415 = vmatprep.subr.mxu0 0.0
    %1416 = vmatpush1.msra.mxu0 %v1291
    %1417 = vmatprep.subr.mxu0 0.0
    %1418 = vmatpush1.msra.mxu0 %v1292
    %1419 = vmatprep.subr.mxu0 0.0
    %1420 = vmatpush1.msra.mxu0 %v1293
    %1421 = vmatprep.subr.mxu0 0.0
    %1422 = vmatpush1.msra.mxu0 %v1294
    %1423 = vmatprep.subr.mxu0 0.0
    %1424 = vmatpush1.msra.mxu0 %v1295
    %1425 = vmatprep.subr.mxu0 0.0
    %1426 = vmatpush1.msra.mxu0 %v1296
    %1427 = vmatprep.subr.mxu0 0.0
    %1428 = vmatpush1.msra.mxu0 %v1297
    %1429 = vmatprep.subr.mxu0 0.0
    %1430 = vmatpush1.msra.mxu0 %v1298
    %1431 = vmatprep.subr.mxu0 0.0
    %1432 = vmatpush1.msra.mxu0 %v1299
    %1433 = vmatprep.subr.mxu0 0.0
    %1434 = vmatpush1.msra.mxu0 %v1300
    %1435 = vmatprep.subr.mxu0 0.0
    %1436 = vmatpush1.msra.mxu0 %v1301
    %1437 = vmatprep.subr.mxu0 0.0
    %1438 = vmatpush1.msra.mxu0 %v1302
    %1439 = vmatprep.subr.mxu0 0.0
    %1440 = vmatpush1.msra.mxu0 %v1303
    %1441 = vmatprep.subr.mxu0 0.0
    %1442 = vmatpush1.msra.mxu0 %v1304
    %1443 = vmatprep.subr.mxu0 0.0
    %1444 = vmatpush1.msra.mxu0 %v1305
    %1445 = vmatprep.subr.mxu0 0.0
    %1446 = vmatpush1.msra.mxu0 %v1306
    %1447 = vmatprep.subr.mxu0 0.0
    %1448 = vmatpush1.msra.mxu0 %v1307
    %1449 = vmatprep.mubr.f32.mxu0 %v1240
    %1450 = vmatmul.mubr.f32.gmra.mrb[0].mxu0 %v1239
    %v1451 = vpop.f32.mrb[0].mxu0
    %v1452 = vadd.f32 %v1382, %v1451
    %v1453 = vpop.f32.mrb[0].mxu0
    %1454 = vdwg.mxu0
    %v1455 = vmax.f32 %v1452, 0.0
    %1456 = vst [vmem:[#allocation12] sm:$0x3] %v1455
    // Predicated region
    $region70: #{bivision_forward.1} parent=1 // pred_check
      _
    $region71: #{bivision_forward.1} parent=1 // pred_check_branch
      %1458 = sbr.rel (0) target = $region73
    $region72: #{bivision_forward.1} parent=1 // pred_region
      %s1460 = ssub.s32 32, 32
      %1461 = vsyncadd [#allocation6], %s1460
      %s1463 = sshll.u32 [#allocation12], 4
      %s1464 = int_to_ptr.vmem [resolvable:$true] %s1463
      %1466 = dma.vmem_to_hbm [thread:$0]  %s1464, 32, %s13, [#allocation6]
    $region73: #{bivision_forward.1} parent=1 // pred_fallthru
      _
    // Predicated region
    $region74: #{bivision_forward.1} parent=1 // pred_check
      _
    $region75: #{bivision_forward.1} parent=1 // pred_check_branch
      %1468 = sbr.rel (0) target = $region77
    $region76: #{bivision_forward.1} parent=1 // pred_region
      %1469 = dma.done [#allocation6], 32
    $region77: #{bivision_forward.1} parent=1 // pred_fallthru
      _
    %1470 = vsyncpa [#allocation5], 1
    %1471 = vsyncpa [#allocation8], 1
    %1472 = vsyncpa [#allocation11], 1
    %1473 = vsyncpa [#allocation6], 1
  %1474 = vsyncmov [#allocation3]
  %s1475 = vpop.sfrf %1474
  %p1476 = scmp.eq.s32.totalorder %s1475, 0
  %p1477 = pneg %p1476
  %1479 = shalt.err (%p1477)

</llo_original>
